<compile_context>
chip_gen: v7x
topology: tpu7x:2x2x1
jax: 0.10.0
libtpu: 0.0.40
codegen_flags: <defaults>
</compile_context>

<pallas_src>
import functools
import math

import jax
import jax.numpy as jnp
import numpy as np
from jax.experimental import pallas as pl
from jax.experimental.pallas import tpu as pltpu


# --------------------------------------------------------------------------- #
# Model config (scaled-down VGG: conv->ReLU blocks with 'M' max-pools).
# --------------------------------------------------------------------------- #
CFG = (8, "M", 16, "M", 32, "M")
NUM_CLASSES = 10
HIDDEN = 128          # scaled-down stand-in for 4096 (chosen as a multiple of 128)
CPAD = 128            # conv channels padded to 128 lanes inside the kernel path
LANE = 128


def _round_up(x, m):
    return (x + m - 1) // m * m


def _pick_tile(dim, cap):
    """Largest multiple-of-128 tile <= cap that divides dim, else the whole dim."""
    if dim <= cap:
        return dim
    t = (cap // LANE) * LANE
    while t >= LANE:
        if dim % t == 0:
            return t
        t -= LANE
    return dim


def _pick_div(dim, cap):
    t = min(dim, cap)
    while dim % t:
        t -= 1
    return t


# ----------------------------- Pallas kernels ------------------------------ #

def _matmul_bias_act_kernel(x_ref, w_ref, b_ref, o_ref, acc_ref, *, relu):
    """One (tm, tn) output tile; K-grid reduction with f32 VMEM accumulator."""
    @pl.when(pl.program_id(2) == 0)
    def _init():
        acc_ref[...] = jnp.zeros_like(acc_ref)

    acc_ref[...] += jnp.dot(x_ref[...], w_ref[...],
                            preferred_element_type=jnp.float32)

    @pl.when(pl.program_id(2) == pl.num_programs(2) - 1)
    def _finalize():
        acc = acc_ref[...] + b_ref[...]          # bias only in the epilogue
        if relu:
            acc = jnp.maximum(acc, 0.0)
        o_ref[...] = acc.astype(o_ref.dtype)


def matmul_bias_act(x, w, b, relu=False, out_dtype=jnp.bfloat16):
    """Fused (x @ w + b) with optional ReLU.  bf16 MXU inputs, f32 accumulation."""
    M, K = x.shape
    K2, N = w.shape
    assert K == K2 and b.shape == (N,)
    x = x.astype(jnp.bfloat16)
    w = w.astype(jnp.bfloat16)
    b2 = b.reshape(1, N).astype(jnp.float32)

    tm = _pick_tile(M, 256)
    tn = _pick_tile(N, 256)
    tk = _pick_tile(K, 512)
    grid = (M // tm, N // tn, K // tk)

    kernel = functools.partial(_matmul_bias_act_kernel, relu=relu)
    out_bytes = jnp.dtype(out_dtype).itemsize
    cost = pl.CostEstimate(
        flops=2 * M * N * K,
        transcendentals=0,
        bytes_accessed=(M * K + K * N) * 2 + M * N * out_bytes + N * 4)

    return pl.pallas_call(
        kernel,
        out_shape=jax.ShapeDtypeStruct((M, N), out_dtype),
        grid_spec=pltpu.PrefetchScalarGridSpec(
            num_scalar_prefetch=0,
            grid=grid,
            in_specs=[
                pl.BlockSpec((tm, tk), lambda i, j, k: (i, k)),
                pl.BlockSpec((tk, tn), lambda i, j, k: (k, j)),
                pl.BlockSpec((1, tn), lambda i, j, k: (0, j)),
            ],
            out_specs=pl.BlockSpec((tm, tn), lambda i, j, k: (i, j)),
            scratch_shapes=[pltpu.VMEM((tm, tn), jnp.float32)],
        ),
        compiler_params=pltpu.CompilerParams(
            dimension_semantics=("parallel", "parallel", "arbitrary"),
            vmem_limit_bytes=32 * 1024 * 1024,
        ),
        cost_estimate=cost,
    )(x, w, b2)


def _maxpool2x2_kernel(x_ref, o_ref):
    """x block: (2*tb, Wo, 2, C)  ->  o block: (tb, Wo, C)   (2x2/2 max-pool)."""
    x = x_ref[...]
    m = jnp.maximum(x[:, :, 0, :], x[:, :, 1, :])   # max over the two W taps
    tb2, Wo, C = m.shape
    m = m.reshape(tb2 // 2, 2, Wo, C)               # leading-dim split (free)
    o_ref[...] = jnp.maximum(m[:, 0], m[:, 1])      # max over the two H taps


def maxpool2x2(x):
    """MaxPool2d(kernel=2, stride=2) in one Pallas pass over the NHWC tensor."""
    N, H, W, C = x.shape
    Ho, Wo = H // 2, W // 2
    # Free (metadata-only) reshape: split W into (Wo, 2), merge N and H.
    xr = x.reshape(N * H, Wo, 2, C)
    R = N * Ho
    tb = _pick_div(R, 256)
    grid = (R // tb,)
    out = pl.pallas_call(
        _maxpool2x2_kernel,
        out_shape=jax.ShapeDtypeStruct((R, Wo, C), x.dtype),
        grid=grid,
        in_specs=[pl.BlockSpec((2 * tb, Wo, 2, C), lambda i: (i, 0, 0, 0))],
        out_specs=pl.BlockSpec((tb, Wo, C), lambda i: (i, 0, 0)),
        compiler_params=pltpu.CompilerParams(
            dimension_semantics=("parallel",)),
    )(xr)
    return out.reshape(N, Ho, Wo, C)


# ------------------------------ JAX glue ----------------------------------- #

def _im2col_3x3(x):
    """x: (N, H, W, C) NHWC -> (N*H*W, 9*C) patches, 'same' padding=1 (dtype kept)."""
    N, H, W, C = x.shape
    xp = jnp.pad(x, ((0, 0), (1, 1), (1, 1), (0, 0)))
    cols = [xp[:, kh:kh + H, kw:kw + W, :] for kh in range(3) for kw in range(3)]
    patches = jnp.concatenate(cols, axis=-1)       # (N, H, W, 9*C), tap-major
    return patches.reshape(N * H * W, 9 * C)


def conv3x3_relu(x, w_hwio, b):
    """Conv2d(k=3, pad=1) + bias + ReLU.  x NHWC bf16, w (3,3,Cin,Cout) bf16."""
    N, H, W, Cin = x.shape
    Cout = w_hwio.shape[-1]
    patches = _im2col_3x3(x)                       # bf16 patches (halved HBM traffic)
    w2 = w_hwio.reshape(9 * Cin, Cout)
    y = matmul_bias_act(patches, w2, b, relu=True, out_dtype=jnp.bfloat16)
    return y.reshape(N, H, W, Cout)


# --------------------------- parameters ------------------------------------ #

def init_params(key, in_channels=3, in_hw=16):
    """Deterministic logical params mirroring VGG._initialize_weights."""
    params = {"convs": [], "fcs": []}
    c, hw = in_channels, in_hw
    for v in CFG:
        if v == "M":
            hw //= 2
            continue
        key, kw = jax.random.split(key)
        n = 3 * 3 * v
        w = jax.random.normal(kw, (3, 3, c, v), jnp.float32) * math.sqrt(2.0 / n)
        params["convs"].append((w, jnp.zeros((v,), jnp.float32)))
        c = v
    flat = c * hw * hw
    for din, dout in [(flat, HIDDEN), (HIDDEN, HIDDEN), (HIDDEN, NUM_CLASSES)]:
        key, kw = jax.random.split(key)
        w = jax.random.normal(kw, (din, dout), jnp.float32) * 0.01
        params["fcs"].append((w, jnp.zeros((dout,), jnp.float32)))
    return params


def pack_params(params):
    """Zero-pad channel / feature dims to multiples of 128 and cast weights to bf16."""
    packed = {"convs": [], "fcs": []}
    for w, b in params["convs"]:
        kh, kw_, cin, cout = w.shape
        wp = jnp.zeros((kh, kw_, CPAD, CPAD), jnp.bfloat16)
        wp = wp.at[:, :, :cin, :cout].set(w.astype(jnp.bfloat16))
        bp = jnp.zeros((CPAD,), jnp.float32).at[:cout].set(b)
        packed["convs"].append((wp, bp))
    for w, b in params["fcs"]:
        din, dout = w.shape
        dinp, doutp = _round_up(din, LANE), _round_up(dout, LANE)
        wp = jnp.zeros((dinp, doutp), jnp.bfloat16)
        wp = wp.at[:din, :dout].set(w.astype(jnp.bfloat16))
        bp = jnp.zeros((doutp,), jnp.float32).at[:dout].set(b)
        packed["fcs"].append((wp, bp))
    packed["c_final"] = params["convs"][-1][0].shape[-1]   # logical channels at flatten
    packed["flat_pad"] = packed["fcs"][0][0].shape[0]
    return packed


# ------------------------------- forward ----------------------------------- #

def vgg_forward(packed, x_nchw):
    """Forward pass matching VGG.forward; input NCHW like PyTorch."""
    x = jnp.transpose(x_nchw, (0, 2, 3, 1)).astype(jnp.bfloat16)   # NCHW -> NHWC bf16
    x = jnp.pad(x, ((0, 0), (0, 0), (0, 0), (0, CPAD - x.shape[-1])))  # lane-dense C
    ci = 0
    for v in CFG:
        if v == "M":
            x = maxpool2x2(x)
        else:
            w, b = packed["convs"][ci]
            x = conv3x3_relu(x, w, b)
            ci += 1
    # PyTorch's x.view(x.size(0), -1) flattens NCHW -> (N, C*H*W) on logical channels.
    n = x.shape[0]
    x = x[..., :packed["c_final"]]
    x = jnp.transpose(x, (0, 3, 1, 2)).reshape(n, -1)
    if x.shape[1] < packed["flat_pad"]:
        x = jnp.pad(x, ((0, 0), (0, packed["flat_pad"] - x.shape[1])))
    (w1, b1), (w2, b2), (w3, b3) = packed["fcs"]
    x = matmul_bias_act(x, w1, b1, relu=True, out_dtype=jnp.bfloat16)   # Linear+ReLU (Dropout=id)
    x = matmul_bias_act(x, w2, b2, relu=True, out_dtype=jnp.bfloat16)   # Linear+ReLU (Dropout=id)
    x = matmul_bias_act(x, w3, b3, relu=False, out_dtype=jnp.float32)   # final Linear
    return x[:, :NUM_CLASSES]


# ----------------------------- pure-JAX reference --------------------------- #

def vgg_reference(params, x_nchw):
    """Logical-shape reference emulating the same bf16-in / f32-accumulate numerics."""
    x = jnp.transpose(x_nchw, (0, 2, 3, 1)).astype(jnp.bfloat16)
    ci = 0
    for v in CFG:
        if v == "M":
            N, H, W, C = x.shape
            x = jnp.max(x.reshape(N, H // 2, 2, W // 2, 2, C), axis=(2, 4))
        else:
            w, b = params["convs"][ci]
            ci += 1
            N, H, W, Cin = x.shape
            y = jnp.dot(_im2col_3x3(x), w.reshape(9 * Cin, -1).astype(jnp.bfloat16),
                        preferred_element_type=jnp.float32) + b
            x = jnp.maximum(y, 0.0).astype(jnp.bfloat16).reshape(N, H, W, -1)
    x = jnp.transpose(x, (0, 3, 1, 2)).reshape(x.shape[0], -1)
    (w1, b1), (w2, b2), (w3, b3) = params["fcs"]
    h = jnp.maximum(jnp.dot(x, w1.astype(jnp.bfloat16),
                            preferred_element_type=jnp.float32) + b1, 0.0).astype(jnp.bfloat16)
    h = jnp.maximum(jnp.dot(h, w2.astype(jnp.bfloat16),
                            preferred_element_type=jnp.float32) + b2, 0.0).astype(jnp.bfloat16)
    return jnp.dot(h, w3.astype(jnp.bfloat16), preferred_element_type=jnp.float32) + b3


# --------------------------------- main ------------------------------------- #

if __name__ == "__main__":
    key = jax.random.PRNGKey(0)
    key, kx = jax.random.split(key)
    x = jax.random.normal(kx, (2, 3, 16, 16), jnp.float32)   # NCHW, like PyTorch

    params = init_params(key, in_channels=3, in_hw=16)
    packed = pack_params(params)

    out = jax.block_until_ready(vgg_forward(packed, x))
    assert out.shape == (2, NUM_CLASSES)

    ref = jax.block_until_ready(vgg_reference(params, x))
    np.testing.assert_allclose(np.asarray(out, np.float32), np.asarray(ref, np.float32),
                               rtol=2e-2, atol=2e-2)

    print("KERNEL_OK")
</pallas_src>

<mosaic_0001>
module attributes {stable_mosaic.version = 11 : i64} {
  func.func @_matmul_bias_act_kernel(%arg0: i32, %arg1: i32, %arg2: i32, %arg3: memref<256x384xbf16, #tpu.memory_space<vmem>>, %arg4: memref<384x128xbf16, #tpu.memory_space<vmem>>, %arg5: memref<1x128xf32, #tpu.memory_space<vmem>>, %arg6: memref<256x128xbf16, #tpu.memory_space<vmem>>, %arg7: memref<256x128xf32, #tpu.memory_space<vmem>>) attributes {dimension_semantics = [#tpu.dimension_semantics<parallel>, #tpu.dimension_semantics<parallel>, #tpu.dimension_semantics<arbitrary>], iteration_bounds = array<i64: 2, 1, 3>, scalar_prefetch = 0 : i64, scratch_operands = 1 : i64, tpu.core_type = #tpu.core_type<tc>, window_params = [{transform_indices = @transform_0, window_bounds = array<i64: 256, 384>}, {transform_indices = @transform_1, window_bounds = array<i64: 384, 128>}, {transform_indices = @transform_2, window_bounds = array<i64: 1, 128>}, {transform_indices = @transform_3, window_bounds = array<i64: 256, 128>}]} {
    %c0_i32 = arith.constant 0 : i32
    %0 = arith.cmpi eq, %arg2, %c0_i32 : i32
    %1 = arith.extui %0 : i1 to i32
    %c0_i32_0 = arith.constant 0 : i32
    %2 = arith.cmpi ne, %1, %c0_i32_0 : i32
    scf.if %2 {
      %cst_9 = arith.constant 0.000000e+00 : f32
      %12 = vector.broadcast %cst_9 : f32 to vector<256x128xf32>
      %c0_10 = arith.constant 0 : index
      %c0_11 = arith.constant 0 : index
      %13 = vector.load %arg7[%c0_10, %c0_11] : memref<256x128xf32, #tpu.memory_space<vmem>>, vector<256x128xf32>
      tpu.vector_store %arg7[%c0_10, %c0_11], %12 {strides = array<i32>} : memref<256x128xf32, #tpu.memory_space<vmem>>, vector<256x128xf32>,
    } else {
    }
    %c0 = arith.constant 0 : index
    %c0_1 = arith.constant 0 : index
    %3 = vector.load %arg7[%c0, %c0_1] : memref<256x128xf32, #tpu.memory_space<vmem>>, vector<256x128xf32>
    %c0_2 = arith.constant 0 : index
    %c0_3 = arith.constant 0 : index
    %4 = vector.load %arg3[%c0_2, %c0_3] : memref<256x384xbf16, #tpu.memory_space<vmem>>, vector<256x384xbf16>
    %c0_4 = arith.constant 0 : index
    %c0_5 = arith.constant 0 : index
    %5 = vector.load %arg4[%c0_4, %c0_5] : memref<384x128xbf16, #tpu.memory_space<vmem>>, vector<384x128xbf16>
    %cst = arith.constant dense<0.000000e+00> : vector<256x128xf32>
    %6 = tpu.matmul %4, %5, %cst {dimension_numbers = #tpu.dot_dimension_numbers<[1], [0], [0], [1], [0, 0, 1, 1], [], []>} : vector<256x384xbf16>, vector<384x128xbf16>, vector<256x128xf32> -> vector<256x128xf32>
    %7 = arith.addf %3, %6 : vector<256x128xf32>
    %c0_6 = arith.constant 0 : index
    %c0_7 = arith.constant 0 : index
    %8 = vector.load %arg7[%c0_6, %c0_7] : memref<256x128xf32, #tpu.memory_space<vmem>>, vector<256x128xf32>
    tpu.vector_store %arg7[%c0_6, %c0_7], %7 {strides = array<i32>} : memref<256x128xf32, #tpu.memory_space<vmem>>, vector<256x128xf32>,
    %c2_i32 = arith.constant 2 : i32
    %9 = arith.cmpi eq, %arg2, %c2_i32 : i32
    %10 = arith.extui %9 : i1 to i32
    %c0_i32_8 = arith.constant 0 : i32
    %11 = arith.cmpi ne, %10, %c0_i32_8 : i32
    scf.if %11 {
      %c0_9 = arith.constant 0 : index
      %c0_10 = arith.constant 0 : index
      %12 = vector.load %arg7[%c0_9, %c0_10] : memref<256x128xf32, #tpu.memory_space<vmem>>, vector<256x128xf32>
      %c0_11 = arith.constant 0 : index
      %c0_12 = arith.constant 0 : index
      %13 = vector.load %arg5[%c0_11, %c0_12] : memref<1x128xf32, #tpu.memory_space<vmem>>, vector<1x128xf32>
      %14 = vector.broadcast %13 : vector<1x128xf32> to vector<256x128xf32>
      %15 = arith.addf %12, %14 : vector<256x128xf32>
      %cst_13 = arith.constant 0.000000e+00 : f32
      %16 = vector.broadcast %cst_13 : f32 to vector<256x128xf32>
      %17 = arith.maximumf %15, %16 : vector<256x128xf32>
      %18 = arith.truncf %17 : vector<256x128xf32> to vector<256x128xbf16>
      %c0_14 = arith.constant 0 : index
      %c0_15 = arith.constant 0 : index
      %19 = vector.load %arg6[%c0_14, %c0_15] : memref<256x128xbf16, #tpu.memory_space<vmem>>, vector<256x128xbf16>
      tpu.vector_store %arg6[%c0_14, %c0_15], %18 {strides = array<i32>} : memref<256x128xbf16, #tpu.memory_space<vmem>>, vector<256x128xbf16>,
    } else {
    }
    return
  }
  func.func @transform_0(%arg0: i32, %arg1: i32, %arg2: i32) -> (i32, i32) {
    %c0_i32 = arith.constant 0 : i32
    return %arg0, %arg2 : i32, i32
  }
  func.func @transform_1(%arg0: i32, %arg1: i32, %arg2: i32) -> (i32, i32) {
    %c0_i32 = arith.constant 0 : i32
    return %arg2, %arg1 : i32, i32
  }
  func.func @transform_2(%arg0: i32, %arg1: i32, %arg2: i32) -> (i32, i32) {
    %c0_i32 = arith.constant 0 : i32
    %c0_i32_0 = arith.constant 0 : i32
    return %c0_i32, %arg1 : i32, i32
  }
  func.func @transform_3(%arg0: i32, %arg1: i32, %arg2: i32) -> (i32, i32) {
    %c0_i32 = arith.constant 0 : i32
    return %arg0, %arg1 : i32, i32
  }
}

</mosaic_0001>

<llo_original>
// kernel: tpu_custom_call.1
$region0: #{tpu_custom_call.1}
  #allocation0 [shape = 'u32[]', space=smem, size = 0x4, offset = 0x4, fixed_abs, tag = 'smem constant byte address 0x4 - core index']
  #allocation1 [shape = 'u32[144,128]{1,0:T(1,128)}', space=vmem, size = 0x12000, scoped, tag = 'internal scratch']
  #allocation2 [shape = 'f32[256,128]{1,0:T(8,128)}', space=vmem, size = 0x20000, scoped, tag = 'scratch operand']
  %s0 = inlined_call_operand.hbm [shape: bf16[512,1152], index: 0, kind: input, shape index: {}]
  %s1 = inlined_call_operand.hbm [shape: bf16[1152,128], index: 1, kind: input, shape index: {}]
  %s2 = inlined_call_operand.hbm [shape: f32[1,128], index: 2, kind: input, shape index: {}]
  %s3 = inlined_call_operand.hbm [shape: bf16[512,128], index: 3, kind: output, shape index: {}]
  %s4 = sld [smem:[#allocation0]]
  $region65: #{tpu_custom_call.1} parent=0
    _
  %s6 = ssub.s32 1, %s4
  %s7 = scalar_select 0, %s6, %s4
  $region1: #{tpu_custom_call.1} parent=0
    #allocation3 [shape = 'u8[393216]{0}', space=vmem, size = 0x60000, scoped, tag = 'input window, operand 0']
    #allocation4 [shape = 's32[2]{0}', space=sflag, size = 0x8, scoped, tag = 'scoped memory for tpu_custom_call.1']
    #allocation5 [shape = 's32[2]{0}', space=sflag, size = 0x8, scoped, tag = 'scoped memory for tpu_custom_call.1']
    #allocation6 [shape = 'u8[196608]{0}', space=vmem, size = 0x30000, scoped, tag = 'input window, operand 1']
    #allocation7 [shape = 's32[2]{0}', space=sflag, size = 0x8, scoped, tag = 'scoped memory for tpu_custom_call.1']
    #allocation8 [shape = 'u8[512]{0}', space=vmem, size = 0x400, scoped, tag = 'input window, operand 2, single buffered']
    #allocation9 [shape = 'u8[131072]{0}', space=vmem, size = 0x20000, scoped, tag = 'output window, operand 0']
    %8 = vsyncpa [#allocation4], 0
    %s9 = scalar_lea.sflag [#allocation4], 1
    %10 = vsyncpa %s9, 0
    %11 = vsyncpa [#allocation7], 0
    %s12 = scalar_lea.sflag [#allocation7], 1
    %13 = vsyncpa %s12, 0
    %14 = vsyncpa [#allocation5], 0
    %s15 = scalar_lea.sflag [#allocation5], 1
    %16 = vsyncpa %s15, 0
    loop: start=0, step=1, limit=8
    $region2: #{tpu_custom_call.1} parent=1 // loop_pre_header
      _
    $region3: #{tpu_custom_call.1} parent=1 // loop_header
      %s18 = sphi 0, %s22
      %p19 = scmp.ge.s32.totalorder %s18, 8
      %s25 = sphi 0, %s44
      %s26 = sphi 0, %s40
      %s27 = sphi 0, %s36
      %s28 = sphi 0, %s25
      %s29 = sphi 0, %s26
      %s30 = sphi 0, %s27
      %s31 = sphi 0, %s28
      %s32 = sphi 0, %s29
      %s33 = sphi 0, %s30
      %s49 = sphi 0, %s51
      %s52 = sphi 0, %s49
      %s53 = sphi 0, %s52
      %s69 = sphi 0, %s53
      %s77 = sphi 0, %s79
      %s80 = sphi 0, %s77
      %s81 = sphi 0, %s80
      %s97 = sphi 0, %s81
      %s103 = sphi 0, %s105
      %s106 = sphi 0, %s103
      %s107 = sphi 0, %s106
      %s123 = sphi 0, %s107
      %s131 = sphi 0, %s133
      %s134 = sphi 0, %s131
      %s135 = sphi 0, %s134
      %s151 = sphi 0, %s135
    $region4: #{tpu_custom_call.1} parent=1 // loop_header_branch
      %21 = sbr.rel (%p19) target = $region8
    $region5: #{tpu_custom_call.1} parent=1 // loop_body
      %s23 = ssub.s32 %s18, 1
      %s24 = ssub.s32 %s18, 2
      %s34 = sadd.s32 1, %s27
      %p35 = scmp.ge.s32.totalorder %s34, 3
      %s36 = scalar_select %p35, 0, %s34
      %s37 = sadd.s32 1, %s26
      %s38 = scalar_select %p35, %s37, %s26
      %p39 = scmp.ge.s32.totalorder %s38, 1
      %s40 = scalar_select %p39, 0, %s38
      %s41 = sadd.s32 1, %s25
      %s42 = scalar_select %p39, %s41, %s25
      %p43 = scmp.ge.s32.totalorder %s42, 2
      %s44 = scalar_select %p43, 0, %s42
      %s45 = ssub.s32 %s25, %s44
      %s46 = ssub.s32 %s27, %s36
      %s47 = sor.u32 %s45, %s46
      %p48 = scmp.eq.s32.totalorder %s47, 0
      %s50 = sadd.s32 %s49, 1
      %s51 = scalar_select %p48, %s49, %s50
      %p54 = pneg %p48
      %p55 = scmp.eq.s32.totalorder %s18, 5
      %p56 = por %p54, %p55
      %p57 = scmp.ne.s32.totalorder %s49, %s52
      %p58 = scmp.eq.s32.totalorder %s18, 0
      %p59 = por %p57, %p58
      %p60 = scmp.ne.s32.totalorder %s49, %s52
      %p61 = scmp.eq.s32.totalorder %s23, 5
      %p62 = por %p60, %p61
      %p63 = scmp.ne.s32.totalorder %s52, %s53
      %p64 = scmp.eq.s32.totalorder %s23, 0
      %p65 = por %p63, %p64
      %p66 = scmp.ne.s32.totalorder %s52, %s53
      %p67 = scmp.eq.s32.totalorder %s24, 5
      %p68 = por %p66, %p67
      %p70 = scmp.ne.s32.totalorder %s53, %s69
      %p71 = scmp.eq.s32.totalorder %s24, 0
      %p72 = por %p70, %p71
      %s73 = ssub.s32 %s27, %s36
      %s74 = ssub.s32 %s26, %s40
      %s75 = sor.u32 %s73, %s74
      %p76 = scmp.eq.s32.totalorder %s75, 0
      %s78 = sadd.s32 %s77, 1
      %s79 = scalar_select %p76, %s77, %s78
      %p82 = pneg %p76
      %p83 = scmp.eq.s32.totalorder %s18, 5
      %p84 = por %p82, %p83
      %p85 = scmp.ne.s32.totalorder %s77, %s80
      %p86 = scmp.eq.s32.totalorder %s18, 0
      %p87 = por %p85, %p86
      %p88 = scmp.ne.s32.totalorder %s77, %s80
      %p89 = scmp.eq.s32.totalorder %s23, 5
      %p90 = por %p88, %p89
      %p91 = scmp.ne.s32.totalorder %s80, %s81
      %p92 = scmp.eq.s32.totalorder %s23, 0
      %p93 = por %p91, %p92
      %p94 = scmp.ne.s32.totalorder %s80, %s81
      %p95 = scmp.eq.s32.totalorder %s24, 5
      %p96 = por %p94, %p95
      %p98 = scmp.ne.s32.totalorder %s81, %s97
      %p99 = scmp.eq.s32.totalorder %s24, 0
      %p100 = por %p98, %p99
      %s101 = ssub.s32 %s26, %s40
      %p102 = scmp.eq.s32.totalorder %s101, 0
      %s104 = sadd.s32 %s103, 1
      %s105 = scalar_select %p102, %s103, %s104
      %p108 = pneg %p102
      %p109 = scmp.eq.s32.totalorder %s18, 5
      %p110 = por %p108, %p109
      %p111 = scmp.ne.s32.totalorder %s103, %s106
      %p112 = scmp.eq.s32.totalorder %s18, 0
      %p113 = por %p111, %p112
      %p114 = scmp.ne.s32.totalorder %s103, %s106
      %p115 = scmp.eq.s32.totalorder %s23, 5
      %p116 = por %p114, %p115
      %p117 = scmp.ne.s32.totalorder %s106, %s107
      %p118 = scmp.eq.s32.totalorder %s23, 0
      %p119 = por %p117, %p118
      %p120 = scmp.ne.s32.totalorder %s106, %s107
      %p121 = scmp.eq.s32.totalorder %s24, 5
      %p122 = por %p120, %p121
      %p124 = scmp.ne.s32.totalorder %s107, %s123
      %p125 = scmp.eq.s32.totalorder %s24, 0
      %p126 = por %p124, %p125
      %s127 = ssub.s32 %s25, %s44
      %s128 = ssub.s32 %s26, %s40
      %s129 = sor.u32 %s127, %s128
      %p130 = scmp.eq.s32.totalorder %s129, 0
      %s132 = sadd.s32 %s131, 1
      %s133 = scalar_select %p130, %s131, %s132
      %p136 = pneg %p130
      %p137 = scmp.eq.s32.totalorder %s18, 5
      %p138 = por %p136, %p137
      %p139 = scmp.ne.s32.totalorder %s131, %s134
      %p140 = scmp.eq.s32.totalorder %s18, 0
      %p141 = por %p139, %p140
      %p142 = scmp.ne.s32.totalorder %s131, %s134
      %p143 = scmp.eq.s32.totalorder %s23, 5
      %p144 = por %p142, %p143
      %p145 = scmp.ne.s32.totalorder %s134, %s135
      %p146 = scmp.eq.s32.totalorder %s23, 0
      %p147 = por %p145, %p146
      %p148 = scmp.ne.s32.totalorder %s134, %s135
      %p149 = scmp.eq.s32.totalorder %s24, 5
      %p150 = por %p148, %p149
      %p152 = scmp.ne.s32.totalorder %s135, %s151
      %p153 = scmp.eq.s32.totalorder %s24, 0
      %p154 = por %p152, %p153
      %p155 = scmp.le.s32.totalorder 1, %s18
      %p156 = scmp.lt.s32.totalorder %s18, 7
      %p157 = pnand %p155, %p156
      %p158 = pneg %p157
      // Predicated region
      $region9: #{tpu_custom_call.1} parent=5 // pred_check
        _
      $region10: #{tpu_custom_call.1} parent=5 // pred_check_branch
        %160 = sbr.rel (%p157) target = $region12
      $region11: #{tpu_custom_call.1} parent=5 // pred_region
        %s161 = ssub.s32 %s18, 1
        // Predicated region
        $region13: #{tpu_custom_call.1} parent=11 // pred_check
          %p162 = pneg %p119
        $region14: #{tpu_custom_call.1} parent=11 // pred_check_branch
          %164 = sbr.rel (%p162) target = $region16
        $region15: #{tpu_custom_call.1} parent=11 // pred_region
          %s166 = ssub.s32 16, 16
          %167 = vsyncadd [#allocation7], %s166
          %s168 = smul.addr %s29, 16
          %s169 = scalar_lea.hbm %s2, %s168
          %s171 = sshll.u32 [#allocation8], 4
          %s172 = int_to_ptr.vmem [resolvable:$true] %s171
          %174 = dma.hbm_to_vmem [thread:$0]  %s169, 16, %s172, [#allocation7]
        $region16: #{tpu_custom_call.1} parent=11 // pred_fallthru
          _
      $region12: #{tpu_custom_call.1} parent=5 // pred_fallthru
        _
      %p175 = scmp.lt.s32.totalorder %s18, 6
      // Predicated region
      $region17: #{tpu_custom_call.1} parent=5 // pred_check
        %p176 = pneg %p175
      $region18: #{tpu_custom_call.1} parent=5 // pred_check_branch
        %178 = sbr.rel (%p176) target = $region20
      $region19: #{tpu_custom_call.1} parent=5 // pred_region
        // Predicated region
        $region21: #{tpu_custom_call.1} parent=19 // pred_check
          %p179 = pneg %p59
        $region22: #{tpu_custom_call.1} parent=19 // pred_check_branch
          %181 = sbr.rel (%p179) target = $region24
        $region23: #{tpu_custom_call.1} parent=19 // pred_region
          %s182 = sand.u32 %s49, 1
          %s183 = scalar_lea.sflag [#allocation4], %s182
          %s184 = sand.u32 %s49, 1
          %s185 = smul.addr %s184, 384
          %s186 = scalar_lea.vmem [#allocation3], %s185
          %s187 = smul.u32 32, %s25
          %s188 = smul.u32 3, %s27
          %s190 = ssub.s32 6144, 6144
          %191 = vsyncadd %s183, %s190
          %s192 = smul.addr %s187, 9
          %s193 = sadd.s32 %s188, %s192
          %s194 = smul.addr %s193, 64
          %s195 = scalar_lea.hbm %s0, %s194
          %s196 = sshll.u32 %s186, 4
          %s197 = int_to_ptr.vmem [resolvable:$true] %s196
          %202 = dma.hbm_to_vmem [thread:$0]  %s195, 6144, %s197, %s183, 576, 192, 12
        $region24: #{tpu_custom_call.1} parent=19 // pred_fallthru
          _
        // Predicated region
        $region25: #{tpu_custom_call.1} parent=19 // pred_check
          %p203 = pneg %p87
        $region26: #{tpu_custom_call.1} parent=19 // pred_check_branch
          %205 = sbr.rel (%p203) target = $region28
        $region27: #{tpu_custom_call.1} parent=19 // pred_region
          %s206 = sand.u32 %s18, 1
          %s207 = scalar_lea.sflag [#allocation7], %s206
          %s208 = sand.u32 %s77, 1
          %s209 = smul.addr %s208, 192
          %s210 = scalar_lea.vmem [#allocation6], %s209
          %s211 = smul.u32 48, %s27
          %s213 = ssub.s32 3072, 3072
          %214 = vsyncadd %s207, %s213
          %s215 = sadd.s32 %s26, %s211
          %s216 = smul.addr %s215, 64
          %s217 = scalar_lea.hbm %s1, %s216
          %s218 = sshll.u32 %s210, 4
          %s219 = int_to_ptr.vmem [resolvable:$true] %s218
          %224 = dma.hbm_to_vmem [thread:$0]  %s217, 3072, %s219, %s207, 64, 64, 4
        $region28: #{tpu_custom_call.1} parent=19 // pred_fallthru
          _
      $region20: #{tpu_custom_call.1} parent=5 // pred_fallthru
        _
      %p225 = scmp.le.s32.totalorder 1, %s18
      %p226 = scmp.lt.s32.totalorder %s18, 7
      %p227 = pnand %p225, %p226
      %p228 = pneg %p227
      // Predicated region
      $region29: #{tpu_custom_call.1} parent=5 // pred_check
        _
      $region30: #{tpu_custom_call.1} parent=5 // pred_check_branch
        %230 = sbr.rel (%p227) target = $region32
      $region31: #{tpu_custom_call.1} parent=5 // pred_region
        %s231 = ssub.s32 %s18, 1
        %s232 = sand.u32 %s52, 1
        %s233 = scalar_lea.sflag [#allocation4], %s232
        %s234 = sand.u32 %s52, 1
        %s235 = smul.addr %s234, 384
        %s236 = scalar_lea.vmem [#allocation3], %s235
        // Predicated region
        $region33: #{tpu_custom_call.1} parent=31 // pred_check
          %p237 = pneg %p65
        $region34: #{tpu_custom_call.1} parent=31 // pred_check_branch
          %239 = sbr.rel (%p237) target = $region36
        $region35: #{tpu_custom_call.1} parent=31 // pred_region
          %240 = dma.done %s233, 6144
        $region36: #{tpu_custom_call.1} parent=31 // pred_fallthru
          _
        %s241 = sand.u32 %s23, 1
        %s242 = scalar_lea.sflag [#allocation7], %s241
        %s243 = sand.u32 %s80, 1
        %s244 = smul.addr %s243, 192
        %s245 = scalar_lea.vmem [#allocation6], %s244
        // Predicated region
        $region37: #{tpu_custom_call.1} parent=31 // pred_check
          %p246 = pneg %p93
        $region38: #{tpu_custom_call.1} parent=31 // pred_check_branch
          %248 = sbr.rel (%p246) target = $region40
        $region39: #{tpu_custom_call.1} parent=31 // pred_region
          %249 = dma.done %s242, 3072
        $region40: #{tpu_custom_call.1} parent=31 // pred_fallthru
          _
        // Predicated region
        $region41: #{tpu_custom_call.1} parent=31 // pred_check
          %p250 = pneg %p119
        $region42: #{tpu_custom_call.1} parent=31 // pred_check_branch
          %252 = sbr.rel (%p250) target = $region44
        $region43: #{tpu_custom_call.1} parent=31 // pred_region
          %253 = dma.done [#allocation7], 16
        $region44: #{tpu_custom_call.1} parent=31 // pred_fallthru
          _
        %s254 = sand.u32 %s52, 1
        %s255 = scalar_lea.sflag [#allocation4], %s254
        %s256 = sand.u32 %s52, 1
        %s257 = smul.addr %s256, 384
        %s258 = scalar_lea.vmem [#allocation3], %s257
        %p259 = pneg %p65
        %p260 = pneg %p62
        %s261 = sand.u32 %s23, 1
        %s262 = scalar_lea.sflag [#allocation7], %s261
        %s263 = sand.u32 %s80, 1
        %s264 = smul.addr %s263, 192
        %s265 = scalar_lea.vmem [#allocation6], %s264
        %p266 = pneg %p93
        %p267 = pneg %p90
        %p268 = pneg %p119
        %p269 = pneg %p116
        %p270 = pneg %p147
        %p271 = pneg %p144
        %s272 = sand.u32 %s134, 1
        %s273 = scalar_lea.sflag [#allocation5], %s272
        %s274 = sand.u32 %s134, 1
        %s275 = smul.addr %s274, 128
        %s276 = scalar_lea.vmem [#allocation9], %s275
        %s277 = smul.u32 32, %s28
        %s278 = smul.u32 3, %s30
        %s279 = smul.u32 48, %s30
        %s280 = smul.u32 32, %s28
        %p282 = scmp.eq.s32.totalorder %s30, 0
        // Predicated region
        $region45: #{tpu_custom_call.1} parent=31 // pred_check
          %p283 = pneg %p282
        $region46: #{tpu_custom_call.1} parent=31 // pred_check_branch
          %285 = sbr.rel (%p283) target = $region48
        $region47: #{tpu_custom_call.1} parent=31 // pred_region
          %286 = vst [vmem:[#allocation2] sm:$0xff] 0.0
          %287 = vst [vmem:[#allocation2 + $0x8] sm:$0xff] 0.0
          %288 = vst [vmem:[#allocation2 + $0x10] sm:$0xff] 0.0
          %289 = vst [vmem:[#allocation2 + $0x18] sm:$0xff] 0.0
          %290 = vst [vmem:[#allocation2 + $0x20] sm:$0xff] 0.0
          %291 = vst [vmem:[#allocation2 + $0x28] sm:$0xff] 0.0
          %292 = vst [vmem:[#allocation2 + $0x30] sm:$0xff] 0.0
          %293 = vst [vmem:[#allocation2 + $0x38] sm:$0xff] 0.0
          %294 = vst [vmem:[#allocation2 + $0x40] sm:$0xff] 0.0
          %295 = vst [vmem:[#allocation2 + $0x48] sm:$0xff] 0.0
          %296 = vst [vmem:[#allocation2 + $0x50] sm:$0xff] 0.0
          %297 = vst [vmem:[#allocation2 + $0x58] sm:$0xff] 0.0
          %298 = vst [vmem:[#allocation2 + $0x60] sm:$0xff] 0.0
          %299 = vst [vmem:[#allocation2 + $0x68] sm:$0xff] 0.0
          %300 = vst [vmem:[#allocation2 + $0x70] sm:$0xff] 0.0
          %301 = vst [vmem:[#allocation2 + $0x78] sm:$0xff] 0.0
          %302 = vst [vmem:[#allocation2 + $0x80] sm:$0xff] 0.0
          %303 = vst [vmem:[#allocation2 + $0x88] sm:$0xff] 0.0
          %304 = vst [vmem:[#allocation2 + $0x90] sm:$0xff] 0.0
          %305 = vst [vmem:[#allocation2 + $0x98] sm:$0xff] 0.0
          %306 = vst [vmem:[#allocation2 + $0xa0] sm:$0xff] 0.0
          %307 = vst [vmem:[#allocation2 + $0xa8] sm:$0xff] 0.0
          %308 = vst [vmem:[#allocation2 + $0xb0] sm:$0xff] 0.0
          %309 = vst [vmem:[#allocation2 + $0xb8] sm:$0xff] 0.0
          %310 = vst [vmem:[#allocation2 + $0xc0] sm:$0xff] 0.0
          %311 = vst [vmem:[#allocation2 + $0xc8] sm:$0xff] 0.0
          %312 = vst [vmem:[#allocation2 + $0xd0] sm:$0xff] 0.0
          %313 = vst [vmem:[#allocation2 + $0xd8] sm:$0xff] 0.0
          %314 = vst [vmem:[#allocation2 + $0xe0] sm:$0xff] 0.0
          %315 = vst [vmem:[#allocation2 + $0xe8] sm:$0xff] 0.0
          %316 = vst [vmem:[#allocation2 + $0xf0] sm:$0xff] 0.0
          %317 = vst [vmem:[#allocation2 + $0xf8] sm:$0xff] 0.0
        $region48: #{tpu_custom_call.1} parent=31 // pred_fallthru
          _
        %v318 = vld [vmem:[#allocation2] sm:$0xff]
        %v319 = vld [vmem:[#allocation2 + $0x8] sm:$0xff]
        %v320 = vld [vmem:[#allocation2 + $0x10] sm:$0xff]
        %v321 = vld [vmem:[#allocation2 + $0x18] sm:$0xff]
        %v322 = vld [vmem:[#allocation2 + $0x20] sm:$0xff]
        %v323 = vld [vmem:[#allocation2 + $0x28] sm:$0xff]
        %v324 = vld [vmem:[#allocation2 + $0x30] sm:$0xff]
        %v325 = vld [vmem:[#allocation2 + $0x38] sm:$0xff]
        %v326 = vld [vmem:[#allocation2 + $0x40] sm:$0xff]
        %v327 = vld [vmem:[#allocation2 + $0x48] sm:$0xff]
        %v328 = vld [vmem:[#allocation2 + $0x50] sm:$0xff]
        %v329 = vld [vmem:[#allocation2 + $0x58] sm:$0xff]
        %v330 = vld [vmem:[#allocation2 + $0x60] sm:$0xff]
        %v331 = vld [vmem:[#allocation2 + $0x68] sm:$0xff]
        %v332 = vld [vmem:[#allocation2 + $0x70] sm:$0xff]
        %v333 = vld [vmem:[#allocation2 + $0x78] sm:$0xff]
        %v334 = vld [vmem:[#allocation2 + $0x80] sm:$0xff]
        %v335 = vld [vmem:[#allocation2 + $0x88] sm:$0xff]
        %v336 = vld [vmem:[#allocation2 + $0x90] sm:$0xff]
        %v337 = vld [vmem:[#allocation2 + $0x98] sm:$0xff]
        %v338 = vld [vmem:[#allocation2 + $0xa0] sm:$0xff]
        %v339 = vld [vmem:[#allocation2 + $0xa8] sm:$0xff]
        %v340 = vld [vmem:[#allocation2 + $0xb0] sm:$0xff]
        %v341 = vld [vmem:[#allocation2 + $0xb8] sm:$0xff]
        %v342 = vld [vmem:[#allocation2 + $0xc0] sm:$0xff]
        %v343 = vld [vmem:[#allocation2 + $0xc8] sm:$0xff]
        %v344 = vld [vmem:[#allocation2 + $0xd0] sm:$0xff]
        %v345 = vld [vmem:[#allocation2 + $0xd8] sm:$0xff]
        %v346 = vld [vmem:[#allocation2 + $0xe0] sm:$0xff]
        %v347 = vld [vmem:[#allocation2 + $0xe8] sm:$0xff]
        %v348 = vld [vmem:[#allocation2 + $0xf0] sm:$0xff]
        %v349 = vld [vmem:[#allocation2 + $0xf8] sm:$0xff]
        %v350 = vld [vmem:[%s236] sm:$0xff]
        %v351 = vld [vmem:[%s236 + $0x8] sm:$0xf]
        %v352 = vld [vmem:[%s236 + $0xc] sm:$0xff]
        %v353 = vld [vmem:[%s236 + $0x14] sm:$0xf]
        %v354 = vld [vmem:[%s236 + $0x18] sm:$0xff]
        %v355 = vld [vmem:[%s236 + $0x20] sm:$0xf]
        %v356 = vld [vmem:[%s236 + $0x24] sm:$0xff]
        %v357 = vld [vmem:[%s236 + $0x2c] sm:$0xf]
        %v358 = vld [vmem:[%s236 + $0x30] sm:$0xff]
        %v359 = vld [vmem:[%s236 + $0x38] sm:$0xf]
        %v360 = vld [vmem:[%s236 + $0x3c] sm:$0xff]
        %v361 = vld [vmem:[%s236 + $0x44] sm:$0xf]
        %v362 = vld [vmem:[%s236 + $0x48] sm:$0xff]
        %v363 = vld [vmem:[%s236 + $0x50] sm:$0xf]
        %v364 = vld [vmem:[%s236 + $0x54] sm:$0xff]
        %v365 = vld [vmem:[%s236 + $0x5c] sm:$0xf]
        %v366 = vld [vmem:[%s236 + $0x60] sm:$0xff]
        %v367 = vld [vmem:[%s236 + $0x68] sm:$0xf]
        %v368 = vld [vmem:[%s236 + $0x6c] sm:$0xff]
        %v369 = vld [vmem:[%s236 + $0x74] sm:$0xf]
        %v370 = vld [vmem:[%s236 + $0x78] sm:$0xff]
        %v371 = vld [vmem:[%s236 + $0x80] sm:$0xf]
        %v372 = vld [vmem:[%s236 + $0x84] sm:$0xff]
        %v373 = vld [vmem:[%s236 + $0x8c] sm:$0xf]
        %v374 = vld [vmem:[%s236 + $0x90] sm:$0xff]
        %v375 = vld [vmem:[%s236 + $0x98] sm:$0xf]
        %v376 = vld [vmem:[%s236 + $0x9c] sm:$0xff]
        %v377 = vld [vmem:[%s236 + $0xa4] sm:$0xf]
        %v378 = vld [vmem:[%s236 + $0xa8] sm:$0xff]
        %v379 = vld [vmem:[%s236 + $0xb0] sm:$0xf]
        %v380 = vld [vmem:[%s236 + $0xb4] sm:$0xff]
        %v381 = vld [vmem:[%s236 + $0xbc] sm:$0xf]
        %v382 = vld [vmem:[%s236 + $0xc0] sm:$0xff]
        %v383 = vld [vmem:[%s236 + $0xc8] sm:$0xf]
        %v384 = vld [vmem:[%s236 + $0xcc] sm:$0xff]
        %v385 = vld [vmem:[%s236 + $0xd4] sm:$0xf]
        %v386 = vld [vmem:[%s236 + $0xd8] sm:$0xff]
        %v387 = vld [vmem:[%s236 + $0xe0] sm:$0xf]
        %v388 = vld [vmem:[%s236 + $0xe4] sm:$0xff]
        %v389 = vld [vmem:[%s236 + $0xec] sm:$0xf]
        %v390 = vld [vmem:[%s236 + $0xf0] sm:$0xff]
        %v391 = vld [vmem:[%s236 + $0xf8] sm:$0xf]
        %v392 = vld [vmem:[%s236 + $0xfc] sm:$0xff]
        %v393 = vld [vmem:[%s236 + $0x104] sm:$0xf]
        %v394 = vld [vmem:[%s236 + $0x108] sm:$0xff]
        %v395 = vld [vmem:[%s236 + $0x110] sm:$0xf]
        %v396 = vld [vmem:[%s236 + $0x114] sm:$0xff]
        %v397 = vld [vmem:[%s236 + $0x11c] sm:$0xf]
        %v398 = vld [vmem:[%s236 + $0x120] sm:$0xff]
        %v399 = vld [vmem:[%s236 + $0x128] sm:$0xf]
        %v400 = vld [vmem:[%s236 + $0x12c] sm:$0xff]
        %v401 = vld [vmem:[%s236 + $0x134] sm:$0xf]
        %v402 = vld [vmem:[%s236 + $0x138] sm:$0xff]
        %v403 = vld [vmem:[%s236 + $0x140] sm:$0xf]
        %v404 = vld [vmem:[%s236 + $0x144] sm:$0xff]
        %v405 = vld [vmem:[%s236 + $0x14c] sm:$0xf]
        %v406 = vld [vmem:[%s236 + $0x150] sm:$0xff]
        %v407 = vld [vmem:[%s236 + $0x158] sm:$0xf]
        %v408 = vld [vmem:[%s236 + $0x15c] sm:$0xff]
        %v409 = vld [vmem:[%s236 + $0x164] sm:$0xf]
        %v410 = vld [vmem:[%s236 + $0x168] sm:$0xff]
        %v411 = vld [vmem:[%s236 + $0x170] sm:$0xf]
        %v412 = vld [vmem:[%s236 + $0x174] sm:$0xff]
        %v413 = vld [vmem:[%s236 + $0x17c] sm:$0xf]
        %v414 = vld [vmem:[%s245] sm:$0xf]
        %v415 = vld [vmem:[%s245 + $0x4] sm:$0xf]
        %v416 = vld [vmem:[%s245 + $0x8] sm:$0xf]
        %v417 = vld [vmem:[%s245 + $0xc] sm:$0xf]
        %v418 = vld [vmem:[%s245 + $0x10] sm:$0xf]
        %v419 = vld [vmem:[%s245 + $0x14] sm:$0xf]
        %v420 = vld [vmem:[%s245 + $0x18] sm:$0xf]
        %v421 = vld [vmem:[%s245 + $0x1c] sm:$0xf]
        %v422 = vld [vmem:[%s245 + $0x20] sm:$0xf]
        %v423 = vld [vmem:[%s245 + $0x24] sm:$0xf]
        %v424 = vld [vmem:[%s245 + $0x28] sm:$0xf]
        %v425 = vld [vmem:[%s245 + $0x2c] sm:$0xf]
        %v426 = vld [vmem:[%s245 + $0x30] sm:$0xf]
        %v427 = vld [vmem:[%s245 + $0x34] sm:$0xf]
        %v428 = vld [vmem:[%s245 + $0x38] sm:$0xf]
        %v429 = vld [vmem:[%s245 + $0x3c] sm:$0xf]
        %v430 = vld [vmem:[%s245 + $0x40] sm:$0xf]
        %v431 = vld [vmem:[%s245 + $0x44] sm:$0xf]
        %v432 = vld [vmem:[%s245 + $0x48] sm:$0xf]
        %v433 = vld [vmem:[%s245 + $0x4c] sm:$0xf]
        %v434 = vld [vmem:[%s245 + $0x50] sm:$0xf]
        %v435 = vld [vmem:[%s245 + $0x54] sm:$0xf]
        %v436 = vld [vmem:[%s245 + $0x58] sm:$0xf]
        %v437 = vld [vmem:[%s245 + $0x5c] sm:$0xf]
        %v438 = vld [vmem:[%s245 + $0x60] sm:$0xf]
        %v439 = vld [vmem:[%s245 + $0x64] sm:$0xf]
        %v440 = vld [vmem:[%s245 + $0x68] sm:$0xf]
        %v441 = vld [vmem:[%s245 + $0x6c] sm:$0xf]
        %v442 = vld [vmem:[%s245 + $0x70] sm:$0xf]
        %v443 = vld [vmem:[%s245 + $0x74] sm:$0xf]
        %v444 = vld [vmem:[%s245 + $0x78] sm:$0xf]
        %v445 = vld [vmem:[%s245 + $0x7c] sm:$0xf]
        %v446 = vld [vmem:[%s245 + $0x80] sm:$0xf]
        %v447 = vld [vmem:[%s245 + $0x84] sm:$0xf]
        %v448 = vld [vmem:[%s245 + $0x88] sm:$0xf]
        %v449 = vld [vmem:[%s245 + $0x8c] sm:$0xf]
        %v450 = vld [vmem:[%s245 + $0x90] sm:$0xf]
        %v451 = vld [vmem:[%s245 + $0x94] sm:$0xf]
        %v452 = vld [vmem:[%s245 + $0x98] sm:$0xf]
        %v453 = vld [vmem:[%s245 + $0x9c] sm:$0xf]
        %v454 = vld [vmem:[%s245 + $0xa0] sm:$0xf]
        %v455 = vld [vmem:[%s245 + $0xa4] sm:$0xf]
        %v456 = vld [vmem:[%s245 + $0xa8] sm:$0xf]
        %v457 = vld [vmem:[%s245 + $0xac] sm:$0xf]
        %v458 = vld [vmem:[%s245 + $0xb0] sm:$0xf]
        %v459 = vld [vmem:[%s245 + $0xb4] sm:$0xf]
        %v460 = vld [vmem:[%s245 + $0xb8] sm:$0xf]
        %v461 = vld [vmem:[%s245 + $0xbc] sm:$0xf]
        %v526 = vunpack.c.l.b16 %v350
        %v527 = vunpack.c.h.b16 %v350
        %v528 = vunpack.c.l.b16 %v351
        %v529 = vunpack.c.l.b16 %v352
        %v530 = vunpack.c.h.b16 %v352
        %v531 = vunpack.c.l.b16 %v353
        %v532 = vunpack.c.l.b16 %v354
        %v533 = vunpack.c.h.b16 %v354
        %v534 = vunpack.c.l.b16 %v355
        %v535 = vunpack.c.l.b16 %v356
        %v536 = vunpack.c.h.b16 %v356
        %v537 = vunpack.c.l.b16 %v357
        %v538 = vunpack.c.l.b16 %v358
        %v539 = vunpack.c.h.b16 %v358
        %v540 = vunpack.c.l.b16 %v359
        %v541 = vunpack.c.l.b16 %v360
        %v542 = vunpack.c.h.b16 %v360
        %v543 = vunpack.c.l.b16 %v361
        %v544 = vunpack.c.l.b16 %v362
        %v545 = vunpack.c.h.b16 %v362
        %v546 = vunpack.c.l.b16 %v363
        %v547 = vunpack.c.l.b16 %v364
        %v548 = vunpack.c.h.b16 %v364
        %v549 = vunpack.c.l.b16 %v365
        %v550 = vunpack.c.l.b16 %v366
        %v551 = vunpack.c.h.b16 %v366
        %v552 = vunpack.c.l.b16 %v367
        %v553 = vunpack.c.l.b16 %v368
        %v554 = vunpack.c.h.b16 %v368
        %v555 = vunpack.c.l.b16 %v369
        %v556 = vunpack.c.l.b16 %v370
        %v557 = vunpack.c.h.b16 %v370
        %v558 = vunpack.c.l.b16 %v371
        %v559 = vunpack.c.l.b16 %v372
        %v560 = vunpack.c.h.b16 %v372
        %v561 = vunpack.c.l.b16 %v373
        %v562 = vunpack.c.l.b16 %v374
        %v563 = vunpack.c.h.b16 %v374
        %v564 = vunpack.c.l.b16 %v375
        %v565 = vunpack.c.l.b16 %v376
        %v566 = vunpack.c.h.b16 %v376
        %v567 = vunpack.c.l.b16 %v377
        %v568 = vunpack.c.l.b16 %v378
        %v569 = vunpack.c.h.b16 %v378
        %v570 = vunpack.c.l.b16 %v379
        %v571 = vunpack.c.l.b16 %v380
        %v572 = vunpack.c.h.b16 %v380
        %v573 = vunpack.c.l.b16 %v381
        %v574 = vunpack.c.l.b16 %v382
        %v575 = vunpack.c.h.b16 %v382
        %v576 = vunpack.c.l.b16 %v383
        %v577 = vunpack.c.l.b16 %v384
        %v578 = vunpack.c.h.b16 %v384
        %v579 = vunpack.c.l.b16 %v385
        %v580 = vunpack.c.l.b16 %v386
        %v581 = vunpack.c.h.b16 %v386
        %v582 = vunpack.c.l.b16 %v387
        %v583 = vunpack.c.l.b16 %v388
        %v584 = vunpack.c.h.b16 %v388
        %v585 = vunpack.c.l.b16 %v389
        %v586 = vunpack.c.l.b16 %v390
        %v587 = vunpack.c.h.b16 %v390
        %v588 = vunpack.c.l.b16 %v391
        %v589 = vunpack.c.l.b16 %v392
        %v590 = vunpack.c.h.b16 %v392
        %v591 = vunpack.c.l.b16 %v393
        %v592 = vunpack.c.l.b16 %v394
        %v593 = vunpack.c.h.b16 %v394
        %v594 = vunpack.c.l.b16 %v395
        %v595 = vunpack.c.l.b16 %v396
        %v596 = vunpack.c.h.b16 %v396
        %v597 = vunpack.c.l.b16 %v397
        %v598 = vunpack.c.l.b16 %v398
        %v599 = vunpack.c.h.b16 %v398
        %v600 = vunpack.c.l.b16 %v399
        %v601 = vunpack.c.l.b16 %v400
        %v602 = vunpack.c.h.b16 %v400
        %v603 = vunpack.c.l.b16 %v401
        %v604 = vunpack.c.l.b16 %v402
        %v605 = vunpack.c.h.b16 %v402
        %v606 = vunpack.c.l.b16 %v403
        %v607 = vunpack.c.l.b16 %v404
        %v608 = vunpack.c.h.b16 %v404
        %v609 = vunpack.c.l.b16 %v405
        %v610 = vunpack.c.l.b16 %v406
        %v611 = vunpack.c.h.b16 %v406
        %v612 = vunpack.c.l.b16 %v407
        %v613 = vunpack.c.l.b16 %v408
        %v614 = vunpack.c.h.b16 %v408
        %v615 = vunpack.c.l.b16 %v409
        %v616 = vunpack.c.l.b16 %v410
        %v617 = vunpack.c.h.b16 %v410
        %v618 = vunpack.c.l.b16 %v411
        %v619 = vunpack.c.l.b16 %v412
        %v620 = vunpack.c.h.b16 %v412
        %v621 = vunpack.c.l.b16 %v413
        %v622 = vpack.c.b16 %v529, %v526
        %v623 = vpack.c.b16 %v530, %v527
        %v624 = vpack.c.b16 %v531, %v528
        %v625 = vpack.c.b16 %v535, %v532
        %v626 = vpack.c.b16 %v536, %v533
        %v627 = vpack.c.b16 %v537, %v534
        %v628 = vpack.c.b16 %v541, %v538
        %v629 = vpack.c.b16 %v542, %v539
        %v630 = vpack.c.b16 %v543, %v540
        %v631 = vpack.c.b16 %v547, %v544
        %v632 = vpack.c.b16 %v548, %v545
        %v633 = vpack.c.b16 %v549, %v546
        %v634 = vpack.c.b16 %v553, %v550
        %v635 = vpack.c.b16 %v554, %v551
        %v636 = vpack.c.b16 %v555, %v552
        %v637 = vpack.c.b16 %v559, %v556
        %v638 = vpack.c.b16 %v560, %v557
        %v639 = vpack.c.b16 %v561, %v558
        %v640 = vpack.c.b16 %v565, %v562
        %v641 = vpack.c.b16 %v566, %v563
        %v642 = vpack.c.b16 %v567, %v564
        %v643 = vpack.c.b16 %v571, %v568
        %v644 = vpack.c.b16 %v572, %v569
        %v645 = vpack.c.b16 %v573, %v570
        %v646 = vpack.c.b16 %v577, %v574
        %v647 = vpack.c.b16 %v578, %v575
        %v648 = vpack.c.b16 %v579, %v576
        %v649 = vpack.c.b16 %v583, %v580
        %v650 = vpack.c.b16 %v584, %v581
        %v651 = vpack.c.b16 %v585, %v582
        %v652 = vpack.c.b16 %v589, %v586
        %v653 = vpack.c.b16 %v590, %v587
        %v654 = vpack.c.b16 %v591, %v588
        %v655 = vpack.c.b16 %v595, %v592
        %v656 = vpack.c.b16 %v596, %v593
        %v657 = vpack.c.b16 %v597, %v594
        %v658 = vpack.c.b16 %v601, %v598
        %v659 = vpack.c.b16 %v602, %v599
        %v660 = vpack.c.b16 %v603, %v600
        %v661 = vpack.c.b16 %v607, %v604
        %v662 = vpack.c.b16 %v608, %v605
        %v663 = vpack.c.b16 %v609, %v606
        %v664 = vpack.c.b16 %v613, %v610
        %v665 = vpack.c.b16 %v614, %v611
        %v666 = vpack.c.b16 %v615, %v612
        %v667 = vpack.c.b16 %v619, %v616
        %v668 = vpack.c.b16 %v620, %v617
        %v669 = vpack.c.b16 %v621, %v618
        %v766 = vunpack.c.l.b16 %v414
        %v767 = vunpack.c.l.b16 %v415
        %v768 = vunpack.c.l.b16 %v416
        %v769 = vunpack.c.l.b16 %v417
        %v770 = vunpack.c.l.b16 %v418
        %v771 = vunpack.c.l.b16 %v419
        %v772 = vunpack.c.l.b16 %v420
        %v773 = vunpack.c.l.b16 %v421
        %v774 = vunpack.c.l.b16 %v422
        %v775 = vunpack.c.l.b16 %v423
        %v776 = vunpack.c.l.b16 %v424
        %v777 = vunpack.c.l.b16 %v425
        %v778 = vunpack.c.l.b16 %v426
        %v779 = vunpack.c.l.b16 %v427
        %v780 = vunpack.c.l.b16 %v428
        %v781 = vunpack.c.l.b16 %v429
        %v782 = vunpack.c.l.b16 %v430
        %v783 = vunpack.c.l.b16 %v431
        %v784 = vunpack.c.l.b16 %v432
        %v785 = vunpack.c.l.b16 %v433
        %v786 = vunpack.c.l.b16 %v434
        %v787 = vunpack.c.l.b16 %v435
        %v788 = vunpack.c.l.b16 %v436
        %v789 = vunpack.c.l.b16 %v437
        %v790 = vunpack.c.l.b16 %v438
        %v791 = vunpack.c.l.b16 %v439
        %v792 = vunpack.c.l.b16 %v440
        %v793 = vunpack.c.l.b16 %v441
        %v794 = vunpack.c.l.b16 %v442
        %v795 = vunpack.c.l.b16 %v443
        %v796 = vunpack.c.l.b16 %v444
        %v797 = vunpack.c.l.b16 %v445
        %v798 = vunpack.c.l.b16 %v446
        %v799 = vunpack.c.l.b16 %v447
        %v800 = vunpack.c.l.b16 %v448
        %v801 = vunpack.c.l.b16 %v449
        %v802 = vunpack.c.l.b16 %v450
        %v803 = vunpack.c.l.b16 %v451
        %v804 = vunpack.c.l.b16 %v452
        %v805 = vunpack.c.l.b16 %v453
        %v806 = vunpack.c.l.b16 %v454
        %v807 = vunpack.c.l.b16 %v455
        %v808 = vunpack.c.l.b16 %v456
        %v809 = vunpack.c.l.b16 %v457
        %v810 = vunpack.c.l.b16 %v458
        %v811 = vunpack.c.l.b16 %v459
        %v812 = vunpack.c.l.b16 %v460
        %v813 = vunpack.c.l.b16 %v461
        %v814 = vpack.c.b16 %v767, %v766
        %v815 = vpack.c.b16 %v769, %v768
        %v816 = vpack.c.b16 %v771, %v770
        %v817 = vpack.c.b16 %v773, %v772
        %v818 = vpack.c.b16 %v775, %v774
        %v819 = vpack.c.b16 %v777, %v776
        %v820 = vpack.c.b16 %v779, %v778
        %v821 = vpack.c.b16 %v781, %v780
        %v822 = vpack.c.b16 %v783, %v782
        %v823 = vpack.c.b16 %v785, %v784
        %v824 = vpack.c.b16 %v787, %v786
        %v825 = vpack.c.b16 %v789, %v788
        %v826 = vpack.c.b16 %v791, %v790
        %v827 = vpack.c.b16 %v793, %v792
        %v828 = vpack.c.b16 %v795, %v794
        %v829 = vpack.c.b16 %v797, %v796
        %v830 = vpack.c.b16 %v799, %v798
        %v831 = vpack.c.b16 %v801, %v800
        %v832 = vpack.c.b16 %v803, %v802
        %v833 = vpack.c.b16 %v805, %v804
        %v834 = vpack.c.b16 %v807, %v806
        %v835 = vpack.c.b16 %v809, %v808
        %v836 = vpack.c.b16 %v811, %v810
        %v837 = vpack.c.b16 %v813, %v812
        %862 = vmatprep.subr.bf16.mxu0 0
        %863 = vmatpush1.bf16.msra.mxu0 %v814
        %864 = vmatprep.subr.bf16.mxu0 0
        %865 = vmatpush1.bf16.msra.mxu0 %v815
        %866 = vmatprep.subr.bf16.mxu0 0
        %867 = vmatpush1.bf16.msra.mxu0 %v816
        %868 = vmatprep.subr.bf16.mxu0 0
        %869 = vmatpush1.bf16.msra.mxu0 %v817
        %870 = vmatprep.subr.bf16.mxu0 0
        %871 = vmatpush1.bf16.msra.mxu0 %v818
        %872 = vmatprep.subr.bf16.mxu0 0
        %873 = vmatpush1.bf16.msra.mxu0 %v819
        %874 = vmatprep.subr.bf16.mxu0 0
        %875 = vmatpush1.bf16.msra.mxu0 %v820
        %876 = vmatprep.subr.bf16.mxu0 0
        %877 = vmatpush1.bf16.msra.mxu0 %v821
        %878 = vmatprep.subr.bf16.mxu0 0
        %879 = vmatpush1.bf16.msra.mxu0 %v822
        %880 = vmatprep.subr.bf16.mxu0 0
        %881 = vmatpush1.bf16.msra.mxu0 %v823
        %882 = vmatprep.subr.bf16.mxu0 0
        %883 = vmatpush1.bf16.msra.mxu0 %v824
        %884 = vmatprep.subr.bf16.mxu0 0
        %885 = vmatpush1.bf16.msra.mxu0 %v825
        %886 = vmatprep.subr.bf16.mxu0 0
        %887 = vmatpush1.bf16.msra.mxu0 %v826
        %888 = vmatprep.subr.bf16.mxu0 0
        %889 = vmatpush1.bf16.msra.mxu0 %v827
        %890 = vmatprep.subr.bf16.mxu0 0
        %891 = vmatpush1.bf16.msra.mxu0 %v828
        %892 = vmatprep.subr.bf16.mxu0 0
        %893 = vmatpush1.bf16.msra.mxu0 %v829
        %894 = vmatprep.mubr.bf16.mxu0 %v623
        %895 = vmatmul.mubr.bf16.gmra.mrb[0].mxu0 %v622
        %v896 = vpop.f32.mrb[0].mxu0
        %v897 = vadd.f32 0.0, %v896
        %v898 = vpop.f32.mrb[0].mxu0
        %v899 = vpop.f32.mrb[0].mxu0
        %v900 = vadd.f32 0.0, %v899
        %v901 = vpop.f32.mrb[0].mxu0
        %902 = vmatprep.mubr.bf16.mxu0 %v626
        %903 = vmatmul.mubr.bf16.gmra.mrb[0].mxu0 %v625
        %v904 = vpop.f32.mrb[0].mxu0
        %v905 = vadd.f32 0.0, %v904
        %v906 = vpop.f32.mrb[0].mxu0
        %v907 = vpop.f32.mrb[0].mxu0
        %v908 = vadd.f32 0.0, %v907
        %v909 = vpop.f32.mrb[0].mxu0
        %910 = vmatprep.mubr.bf16.mxu0 %v629
        %911 = vmatmul.mubr.bf16.gmra.mrb[0].mxu0 %v628
        %v912 = vpop.f32.mrb[0].mxu0
        %v913 = vadd.f32 0.0, %v912
        %v914 = vpop.f32.mrb[0].mxu0
        %v915 = vpop.f32.mrb[0].mxu0
        %v916 = vadd.f32 0.0, %v915
        %v917 = vpop.f32.mrb[0].mxu0
        %918 = vmatprep.mubr.bf16.mxu0 %v632
        %919 = vmatmul.mubr.bf16.gmra.mrb[0].mxu0 %v631
        %v920 = vpop.f32.mrb[0].mxu0
        %v921 = vadd.f32 0.0, %v920
        %v922 = vpop.f32.mrb[0].mxu0
        %v923 = vpop.f32.mrb[0].mxu0
        %v924 = vadd.f32 0.0, %v923
        %v925 = vpop.f32.mrb[0].mxu0
        %926 = vmatprep.mubr.bf16.mxu0 %v635
        %927 = vmatmul.mubr.bf16.gmra.mrb[0].mxu0 %v634
        %v928 = vpop.f32.mrb[0].mxu0
        %v929 = vadd.f32 0.0, %v928
        %v930 = vpop.f32.mrb[0].mxu0
        %v931 = vpop.f32.mrb[0].mxu0
        %v932 = vadd.f32 0.0, %v931
        %v933 = vpop.f32.mrb[0].mxu0
        %934 = vmatprep.mubr.bf16.mxu0 %v638
        %935 = vmatmul.mubr.bf16.gmra.mrb[0].mxu0 %v637
        %v936 = vpop.f32.mrb[0].mxu0
        %v937 = vadd.f32 0.0, %v936
        %v938 = vpop.f32.mrb[0].mxu0
        %v939 = vpop.f32.mrb[0].mxu0
        %v940 = vadd.f32 0.0, %v939
        %v941 = vpop.f32.mrb[0].mxu0
        %942 = vmatprep.mubr.bf16.mxu0 %v641
        %943 = vmatmul.mubr.bf16.gmra.mrb[0].mxu0 %v640
        %v944 = vpop.f32.mrb[0].mxu0
        %v945 = vadd.f32 0.0, %v944
        %v946 = vpop.f32.mrb[0].mxu0
        %v947 = vpop.f32.mrb[0].mxu0
        %v948 = vadd.f32 0.0, %v947
        %v949 = vpop.f32.mrb[0].mxu0
        %950 = vmatprep.mubr.bf16.mxu0 %v644
        %951 = vmatmul.mubr.bf16.gmra.mrb[0].mxu0 %v643
        %v952 = vpop.f32.mrb[0].mxu0
        %v953 = vadd.f32 0.0, %v952
        %v954 = vpop.f32.mrb[0].mxu0
        %v955 = vpop.f32.mrb[0].mxu0
        %v956 = vadd.f32 0.0, %v955
        %v957 = vpop.f32.mrb[0].mxu0
        %958 = vmatprep.mubr.bf16.mxu0 %v647
        %959 = vmatmul.mubr.bf16.gmra.mrb[0].mxu0 %v646
        %v960 = vpop.f32.mrb[0].mxu0
        %v961 = vadd.f32 0.0, %v960
        %v962 = vpop.f32.mrb[0].mxu0
        %v963 = vpop.f32.mrb[0].mxu0
        %v964 = vadd.f32 0.0, %v963
        %v965 = vpop.f32.mrb[0].mxu0
        %966 = vmatprep.mubr.bf16.mxu0 %v650
        %967 = vmatmul.mubr.bf16.gmra.mrb[0].mxu0 %v649
        %v968 = vpop.f32.mrb[0].mxu0
        %v969 = vadd.f32 0.0, %v968
        %v970 = vpop.f32.mrb[0].mxu0
        %v971 = vpop.f32.mrb[0].mxu0
        %v972 = vadd.f32 0.0, %v971
        %v973 = vpop.f32.mrb[0].mxu0
        %974 = vmatprep.mubr.bf16.mxu0 %v653
        %975 = vmatmul.mubr.bf16.gmra.mrb[0].mxu0 %v652
        %v976 = vpop.f32.mrb[0].mxu0
        %v977 = vadd.f32 0.0, %v976
        %v978 = vpop.f32.mrb[0].mxu0
        %v979 = vpop.f32.mrb[0].mxu0
        %v980 = vadd.f32 0.0, %v979
        %v981 = vpop.f32.mrb[0].mxu0
        %982 = vmatprep.mubr.bf16.mxu0 %v656
        %983 = vmatmul.mubr.bf16.gmra.mrb[0].mxu0 %v655
        %v984 = vpop.f32.mrb[0].mxu0
        %v985 = vadd.f32 0.0, %v984
        %v986 = vpop.f32.mrb[0].mxu0
        %v987 = vpop.f32.mrb[0].mxu0
        %v988 = vadd.f32 0.0, %v987
        %v989 = vpop.f32.mrb[0].mxu0
        %990 = vmatprep.mubr.bf16.mxu0 %v659
        %991 = vmatmul.mubr.bf16.gmra.mrb[0].mxu0 %v658
        %v992 = vpop.f32.mrb[0].mxu0
        %v993 = vadd.f32 0.0, %v992
        %v994 = vpop.f32.mrb[0].mxu0
        %v995 = vpop.f32.mrb[0].mxu0
        %v996 = vadd.f32 0.0, %v995
        %v997 = vpop.f32.mrb[0].mxu0
        %998 = vmatprep.mubr.bf16.mxu0 %v662
        %999 = vmatmul.mubr.bf16.gmra.mrb[0].mxu0 %v661
        %v1000 = vpop.f32.mrb[0].mxu0
        %v1001 = vadd.f32 0.0, %v1000
        %v1002 = vpop.f32.mrb[0].mxu0
        %v1003 = vpop.f32.mrb[0].mxu0
        %v1004 = vadd.f32 0.0, %v1003
        %v1005 = vpop.f32.mrb[0].mxu0
        %1006 = vmatprep.mubr.bf16.mxu0 %v665
        %1007 = vmatmul.mubr.bf16.gmra.mrb[0].mxu0 %v664
        %v1008 = vpop.f32.mrb[0].mxu0
        %v1009 = vadd.f32 0.0, %v1008
        %v1010 = vpop.f32.mrb[0].mxu0
        %v1011 = vpop.f32.mrb[0].mxu0
        %v1012 = vadd.f32 0.0, %v1011
        %v1013 = vpop.f32.mrb[0].mxu0
        %1014 = vmatprep.mubr.bf16.mxu0 %v668
        %1015 = vmatmul.mubr.bf16.gmra.mrb[0].mxu0 %v667
        %v1016 = vpop.f32.mrb[0].mxu0
        %v1017 = vadd.f32 0.0, %v1016
        %v1018 = vpop.f32.mrb[0].mxu0
        %v1019 = vpop.f32.mrb[0].mxu0
        %v1020 = vadd.f32 0.0, %v1019
        %v1021 = vpop.f32.mrb[0].mxu0
        %1022 = vdwg.mxu0
        %1023 = vmatprep.subr.bf16.mxu0 0
        %1024 = vmatpush1.bf16.msra.mxu0 %v830
        %1025 = vmatprep.subr.bf16.mxu0 0
        %1026 = vmatpush1.bf16.msra.mxu0 %v831
        %1027 = vmatprep.subr.bf16.mxu0 0
        %1028 = vmatpush1.bf16.msra.mxu0 %v832
        %1029 = vmatprep.subr.bf16.mxu0 0
        %1030 = vmatpush1.bf16.msra.mxu0 %v833
        %1031 = vmatprep.subr.bf16.mxu0 0
        %1032 = vmatpush1.bf16.msra.mxu0 %v834
        %1033 = vmatprep.subr.bf16.mxu0 0
        %1034 = vmatpush1.bf16.msra.mxu0 %v835
        %1035 = vmatprep.subr.bf16.mxu0 0
        %1036 = vmatpush1.bf16.msra.mxu0 %v836
        %1037 = vmatprep.subr.bf16.mxu0 0
        %1038 = vmatpush1.bf16.msra.mxu0 %v837
        %1039 = vmatprep.subr.bf16.mxu0 0
        %1040 = vmatpush1.bf16.msra.mxu0 0
        %1041 = vmatprep.subr.bf16.mxu0 0
        %1042 = vmatpush1.bf16.msra.mxu0 0
        %1043 = vmatprep.subr.bf16.mxu0 0
        %1044 = vmatpush1.bf16.msra.mxu0 0
        %1045 = vmatprep.subr.bf16.mxu0 0
        %1046 = vmatpush1.bf16.msra.mxu0 0
        %1047 = vmatprep.subr.bf16.mxu0 0
        %1048 = vmatpush1.bf16.msra.mxu0 0
        %1049 = vmatprep.subr.bf16.mxu0 0
        %1050 = vmatpush1.bf16.msra.mxu0 0
        %1051 = vmatprep.subr.bf16.mxu0 0
        %1052 = vmatpush1.bf16.msra.mxu0 0
        %1053 = vmatprep.subr.bf16.mxu0 0
        %1054 = vmatpush1.bf16.msra.mxu0 0
        %1055 = vmatprep.mubr.bf16.mxu0 0
        %1056 = vmatmul.mubr.bf16.gmra.mrb[0].mxu0 %v624
        %v1057 = vpop.f32.mrb[0].mxu0
        %v1058 = vadd.f32 %v897, %v1057
        %v1059 = vpop.f32.mrb[0].mxu0
        %v1060 = vpop.f32.mrb[0].mxu0
        %v1061 = vadd.f32 %v900, %v1060
        %v1062 = vpop.f32.mrb[0].mxu0
        %1063 = vmatprep.mubr.bf16.mxu0 0
        %1064 = vmatmul.mubr.bf16.gmra.mrb[0].mxu0 %v627
        %v1065 = vpop.f32.mrb[0].mxu0
        %v1066 = vadd.f32 %v905, %v1065
        %v1067 = vpop.f32.mrb[0].mxu0
        %v1068 = vpop.f32.mrb[0].mxu0
        %v1069 = vadd.f32 %v908, %v1068
        %v1070 = vpop.f32.mrb[0].mxu0
        %1071 = vmatprep.mubr.bf16.mxu0 0
        %1072 = vmatmul.mubr.bf16.gmra.mrb[0].mxu0 %v630
        %v1073 = vpop.f32.mrb[0].mxu0
        %v1074 = vadd.f32 %v913, %v1073
        %v1075 = vpop.f32.mrb[0].mxu0
        %v1076 = vpop.f32.mrb[0].mxu0
        %v1077 = vadd.f32 %v916, %v1076
        %v1078 = vpop.f32.mrb[0].mxu0
        %1079 = vmatprep.mubr.bf16.mxu0 0
        %1080 = vmatmul.mubr.bf16.gmra.mrb[0].mxu0 %v633
        %v1081 = vpop.f32.mrb[0].mxu0
        %v1082 = vadd.f32 %v921, %v1081
        %v1083 = vpop.f32.mrb[0].mxu0
        %v1084 = vpop.f32.mrb[0].mxu0
        %v1085 = vadd.f32 %v924, %v1084
        %v1086 = vpop.f32.mrb[0].mxu0
        %1087 = vmatprep.mubr.bf16.mxu0 0
        %1088 = vmatmul.mubr.bf16.gmra.mrb[0].mxu0 %v636
        %v1089 = vpop.f32.mrb[0].mxu0
        %v1090 = vadd.f32 %v929, %v1089
        %v1091 = vpop.f32.mrb[0].mxu0
        %v1092 = vpop.f32.mrb[0].mxu0
        %v1093 = vadd.f32 %v932, %v1092
        %v1094 = vpop.f32.mrb[0].mxu0
        %1095 = vmatprep.mubr.bf16.mxu0 0
        %1096 = vmatmul.mubr.bf16.gmra.mrb[0].mxu0 %v639
        %v1097 = vpop.f32.mrb[0].mxu0
        %v1098 = vadd.f32 %v937, %v1097
        %v1099 = vpop.f32.mrb[0].mxu0
        %v1100 = vpop.f32.mrb[0].mxu0
        %v1101 = vadd.f32 %v940, %v1100
        %v1102 = vpop.f32.mrb[0].mxu0
        %1103 = vmatprep.mubr.bf16.mxu0 0
        %1104 = vmatmul.mubr.bf16.gmra.mrb[0].mxu0 %v642
        %v1105 = vpop.f32.mrb[0].mxu0
        %v1106 = vadd.f32 %v945, %v1105
        %v1107 = vpop.f32.mrb[0].mxu0
        %v1108 = vpop.f32.mrb[0].mxu0
        %v1109 = vadd.f32 %v948, %v1108
        %v1110 = vpop.f32.mrb[0].mxu0
        %1111 = vmatprep.mubr.bf16.mxu0 0
        %1112 = vmatmul.mubr.bf16.gmra.mrb[0].mxu0 %v645
        %v1113 = vpop.f32.mrb[0].mxu0
        %v1114 = vadd.f32 %v953, %v1113
        %v1115 = vpop.f32.mrb[0].mxu0
        %v1116 = vpop.f32.mrb[0].mxu0
        %v1117 = vadd.f32 %v956, %v1116
        %v1118 = vpop.f32.mrb[0].mxu0
        %1119 = vmatprep.mubr.bf16.mxu0 0
        %1120 = vmatmul.mubr.bf16.gmra.mrb[0].mxu0 %v648
        %v1121 = vpop.f32.mrb[0].mxu0
        %v1122 = vadd.f32 %v961, %v1121
        %v1123 = vpop.f32.mrb[0].mxu0
        %v1124 = vpop.f32.mrb[0].mxu0
        %v1125 = vadd.f32 %v964, %v1124
        %v1126 = vpop.f32.mrb[0].mxu0
        %1127 = vmatprep.mubr.bf16.mxu0 0
        %1128 = vmatmul.mubr.bf16.gmra.mrb[0].mxu0 %v651
        %v1129 = vpop.f32.mrb[0].mxu0
        %v1130 = vadd.f32 %v969, %v1129
        %v1131 = vpop.f32.mrb[0].mxu0
        %v1132 = vpop.f32.mrb[0].mxu0
        %v1133 = vadd.f32 %v972, %v1132
        %v1134 = vpop.f32.mrb[0].mxu0
        %1135 = vmatprep.mubr.bf16.mxu0 0
        %1136 = vmatmul.mubr.bf16.gmra.mrb[0].mxu0 %v654
        %v1137 = vpop.f32.mrb[0].mxu0
        %v1138 = vadd.f32 %v977, %v1137
        %v1139 = vpop.f32.mrb[0].mxu0
        %v1140 = vpop.f32.mrb[0].mxu0
        %v1141 = vadd.f32 %v980, %v1140
        %v1142 = vpop.f32.mrb[0].mxu0
        %1143 = vmatprep.mubr.bf16.mxu0 0
        %1144 = vmatmul.mubr.bf16.gmra.mrb[0].mxu0 %v657
        %v1145 = vpop.f32.mrb[0].mxu0
        %v1146 = vadd.f32 %v985, %v1145
        %v1147 = vpop.f32.mrb[0].mxu0
        %v1148 = vpop.f32.mrb[0].mxu0
        %v1149 = vadd.f32 %v988, %v1148
        %v1150 = vpop.f32.mrb[0].mxu0
        %1151 = vmatprep.mubr.bf16.mxu0 0
        %1152 = vmatmul.mubr.bf16.gmra.mrb[0].mxu0 %v660
        %v1153 = vpop.f32.mrb[0].mxu0
        %v1154 = vadd.f32 %v993, %v1153
        %v1155 = vpop.f32.mrb[0].mxu0
        %v1156 = vpop.f32.mrb[0].mxu0
        %v1157 = vadd.f32 %v996, %v1156
        %v1158 = vpop.f32.mrb[0].mxu0
        %1159 = vmatprep.mubr.bf16.mxu0 0
        %1160 = vmatmul.mubr.bf16.gmra.mrb[0].mxu0 %v663
        %v1161 = vpop.f32.mrb[0].mxu0
        %v1162 = vadd.f32 %v1001, %v1161
        %v1163 = vpop.f32.mrb[0].mxu0
        %v1164 = vpop.f32.mrb[0].mxu0
        %v1165 = vadd.f32 %v1004, %v1164
        %v1166 = vpop.f32.mrb[0].mxu0
        %1167 = vmatprep.mubr.bf16.mxu0 0
        %1168 = vmatmul.mubr.bf16.gmra.mrb[0].mxu0 %v666
        %v1169 = vpop.f32.mrb[0].mxu0
        %v1170 = vadd.f32 %v1009, %v1169
        %v1171 = vpop.f32.mrb[0].mxu0
        %v1172 = vpop.f32.mrb[0].mxu0
        %v1173 = vadd.f32 %v1012, %v1172
        %v1174 = vpop.f32.mrb[0].mxu0
        %1175 = vmatprep.mubr.bf16.mxu0 0
        %1176 = vmatmul.mubr.bf16.gmra.mrb[0].mxu0 %v669
        %v1177 = vpop.f32.mrb[0].mxu0
        %v1178 = vadd.f32 %v1017, %v1177
        %v1179 = vpop.f32.mrb[0].mxu0
        %v1180 = vpop.f32.mrb[0].mxu0
        %v1181 = vadd.f32 %v1020, %v1180
        %v1182 = vpop.f32.mrb[0].mxu0
        %1183 = vdwg.mxu0
        %v1184 = vadd.f32 %v318, %v1058
        %v1185 = vadd.f32 %v319, %v1061
        %v1186 = vadd.f32 %v320, %v1066
        %v1187 = vadd.f32 %v321, %v1069
        %v1188 = vadd.f32 %v322, %v1074
        %v1189 = vadd.f32 %v323, %v1077
        %v1190 = vadd.f32 %v324, %v1082
        %v1191 = vadd.f32 %v325, %v1085
        %v1192 = vadd.f32 %v326, %v1090
        %v1193 = vadd.f32 %v327, %v1093
        %v1194 = vadd.f32 %v328, %v1098
        %v1195 = vadd.f32 %v329, %v1101
        %v1196 = vadd.f32 %v330, %v1106
        %v1197 = vadd.f32 %v331, %v1109
        %v1198 = vadd.f32 %v332, %v1114
        %v1199 = vadd.f32 %v333, %v1117
        %v1200 = vadd.f32 %v334, %v1122
        %v1201 = vadd.f32 %v335, %v1125
        %v1202 = vadd.f32 %v336, %v1130
        %v1203 = vadd.f32 %v337, %v1133
        %v1204 = vadd.f32 %v338, %v1138
        %v1205 = vadd.f32 %v339, %v1141
        %v1206 = vadd.f32 %v340, %v1146
        %v1207 = vadd.f32 %v341, %v1149
        %v1208 = vadd.f32 %v342, %v1154
        %v1209 = vadd.f32 %v343, %v1157
        %v1210 = vadd.f32 %v344, %v1162
        %v1211 = vadd.f32 %v345, %v1165
        %v1212 = vadd.f32 %v346, %v1170
        %v1213 = vadd.f32 %v347, %v1173
        %v1214 = vadd.f32 %v348, %v1178
        %v1215 = vadd.f32 %v349, %v1181
        %1216 = vst [vmem:[#allocation2] sm:$0xff] %v1184
        %1217 = vst [vmem:[#allocation2 + $0x8] sm:$0xff] %v1185
        %1218 = vst [vmem:[#allocation2 + $0x10] sm:$0xff] %v1186
        %1219 = vst [vmem:[#allocation2 + $0x18] sm:$0xff] %v1187
        %1220 = vst [vmem:[#allocation2 + $0x20] sm:$0xff] %v1188
        %1221 = vst [vmem:[#allocation2 + $0x28] sm:$0xff] %v1189
        %1222 = vst [vmem:[#allocation2 + $0x30] sm:$0xff] %v1190
        %1223 = vst [vmem:[#allocation2 + $0x38] sm:$0xff] %v1191
        %1224 = vst [vmem:[#allocation2 + $0x40] sm:$0xff] %v1192
        %1225 = vst [vmem:[#allocation2 + $0x48] sm:$0xff] %v1193
        %1226 = vst [vmem:[#allocation2 + $0x50] sm:$0xff] %v1194
        %1227 = vst [vmem:[#allocation2 + $0x58] sm:$0xff] %v1195
        %1228 = vst [vmem:[#allocation2 + $0x60] sm:$0xff] %v1196
        %1229 = vst [vmem:[#allocation2 + $0x68] sm:$0xff] %v1197
        %1230 = vst [vmem:[#allocation2 + $0x70] sm:$0xff] %v1198
        %1231 = vst [vmem:[#allocation2 + $0x78] sm:$0xff] %v1199
        %1232 = vst [vmem:[#allocation2 + $0x80] sm:$0xff] %v1200
        %1233 = vst [vmem:[#allocation2 + $0x88] sm:$0xff] %v1201
        %1234 = vst [vmem:[#allocation2 + $0x90] sm:$0xff] %v1202
        %1235 = vst [vmem:[#allocation2 + $0x98] sm:$0xff] %v1203
        %1236 = vst [vmem:[#allocation2 + $0xa0] sm:$0xff] %v1204
        %1237 = vst [vmem:[#allocation2 + $0xa8] sm:$0xff] %v1205
        %1238 = vst [vmem:[#allocation2 + $0xb0] sm:$0xff] %v1206
        %1239 = vst [vmem:[#allocation2 + $0xb8] sm:$0xff] %v1207
        %1240 = vst [vmem:[#allocation2 + $0xc0] sm:$0xff] %v1208
        %1241 = vst [vmem:[#allocation2 + $0xc8] sm:$0xff] %v1209
        %1242 = vst [vmem:[#allocation2 + $0xd0] sm:$0xff] %v1210
        %1243 = vst [vmem:[#allocation2 + $0xd8] sm:$0xff] %v1211
        %1244 = vst [vmem:[#allocation2 + $0xe0] sm:$0xff] %v1212
        %1245 = vst [vmem:[#allocation2 + $0xe8] sm:$0xff] %v1213
        %1246 = vst [vmem:[#allocation2 + $0xf0] sm:$0xff] %v1214
        %1247 = vst [vmem:[#allocation2 + $0xf8] sm:$0xff] %v1215
        %p1248 = scmp.eq.s32.totalorder %s30, 2
        // Predicated region
        $region49: #{tpu_custom_call.1} parent=31 // pred_check
          %p1249 = pneg %p1248
        $region50: #{tpu_custom_call.1} parent=31 // pred_check_branch
          %1251 = sbr.rel (%p1249) target = $region52
        $region51: #{tpu_custom_call.1} parent=31 // pred_region
          %v1252 = vld [vmem:[#allocation2] sm:$0xff]
          %v1253 = vld [vmem:[#allocation2 + $0x8] sm:$0xff]
          %v1254 = vld [vmem:[#allocation2 + $0x10] sm:$0xff]
          %v1255 = vld [vmem:[#allocation2 + $0x18] sm:$0xff]
          %v1256 = vld [vmem:[#allocation2 + $0x20] sm:$0xff]
          %v1257 = vld [vmem:[#allocation2 + $0x28] sm:$0xff]
          %v1258 = vld [vmem:[#allocation2 + $0x30] sm:$0xff]
          %v1259 = vld [vmem:[#allocation2 + $0x38] sm:$0xff]
          %v1260 = vld [vmem:[#allocation2 + $0x40] sm:$0xff]
          %v1261 = vld [vmem:[#allocation2 + $0x48] sm:$0xff]
          %v1262 = vld [vmem:[#allocation2 + $0x50] sm:$0xff]
          %v1263 = vld [vmem:[#allocation2 + $0x58] sm:$0xff]
          %v1264 = vld [vmem:[#allocation2 + $0x60] sm:$0xff]
          %v1265 = vld [vmem:[#allocation2 + $0x68] sm:$0xff]
          %v1266 = vld [vmem:[#allocation2 + $0x70] sm:$0xff]
          %v1267 = vld [vmem:[#allocation2 + $0x78] sm:$0xff]
          %v1268 = vld [vmem:[#allocation2 + $0x80] sm:$0xff]
          %v1269 = vld [vmem:[#allocation2 + $0x88] sm:$0xff]
          %v1270 = vld [vmem:[#allocation2 + $0x90] sm:$0xff]
          %v1271 = vld [vmem:[#allocation2 + $0x98] sm:$0xff]
          %v1272 = vld [vmem:[#allocation2 + $0xa0] sm:$0xff]
          %v1273 = vld [vmem:[#allocation2 + $0xa8] sm:$0xff]
          %v1274 = vld [vmem:[#allocation2 + $0xb0] sm:$0xff]
          %v1275 = vld [vmem:[#allocation2 + $0xb8] sm:$0xff]
          %v1276 = vld [vmem:[#allocation2 + $0xc0] sm:$0xff]
          %v1277 = vld [vmem:[#allocation2 + $0xc8] sm:$0xff]
          %v1278 = vld [vmem:[#allocation2 + $0xd0] sm:$0xff]
          %v1279 = vld [vmem:[#allocation2 + $0xd8] sm:$0xff]
          %v1280 = vld [vmem:[#allocation2 + $0xe0] sm:$0xff]
          %v1281 = vld [vmem:[#allocation2 + $0xe8] sm:$0xff]
          %v1282 = vld [vmem:[#allocation2 + $0xf0] sm:$0xff]
          %v1283 = vld [vmem:[#allocation2 + $0xf8] sm:$0xff]
          %v1284 = vld [vmem:[#allocation8] sm:$0x1]
          %v1286 = vlaneseq
          %v1287 = vshrl.u32 %v1286, 7
          %v1288 = vsub.s32 0, %v1287
          %v1289 = vrot.slane %v1284, %v1288
          %v1291 = vadd.f32 %v1252, %v1289
          %v1292 = vadd.f32 %v1253, %v1289
          %v1293 = vadd.f32 %v1254, %v1289
          %v1294 = vadd.f32 %v1255, %v1289
          %v1295 = vadd.f32 %v1256, %v1289
          %v1296 = vadd.f32 %v1257, %v1289
          %v1297 = vadd.f32 %v1258, %v1289
          %v1298 = vadd.f32 %v1259, %v1289
          %v1299 = vadd.f32 %v1260, %v1289
          %v1300 = vadd.f32 %v1261, %v1289
          %v1301 = vadd.f32 %v1262, %v1289
          %v1302 = vadd.f32 %v1263, %v1289
          %v1303 = vadd.f32 %v1264, %v1289
          %v1304 = vadd.f32 %v1265, %v1289
          %v1305 = vadd.f32 %v1266, %v1289
          %v1306 = vadd.f32 %v1267, %v1289
          %v1307 = vadd.f32 %v1268, %v1289
          %v1308 = vadd.f32 %v1269, %v1289
          %v1309 = vadd.f32 %v1270, %v1289
          %v1310 = vadd.f32 %v1271, %v1289
          %v1311 = vadd.f32 %v1272, %v1289
          %v1312 = vadd.f32 %v1273, %v1289
          %v1313 = vadd.f32 %v1274, %v1289
          %v1314 = vadd.f32 %v1275, %v1289
          %v1315 = vadd.f32 %v1276, %v1289
          %v1316 = vadd.f32 %v1277, %v1289
          %v1317 = vadd.f32 %v1278, %v1289
          %v1318 = vadd.f32 %v1279, %v1289
          %v1319 = vadd.f32 %v1280, %v1289
          %v1320 = vadd.f32 %v1281, %v1289
          %v1321 = vadd.f32 %v1282, %v1289
          %v1322 = vadd.f32 %v1283, %v1289
          %v1323 = vmax.f32 %v1291, 0.0
          %v1324 = vmax.f32 %v1292, 0.0
          %v1325 = vmax.f32 %v1293, 0.0
          %v1326 = vmax.f32 %v1294, 0.0
          %v1327 = vmax.f32 %v1295, 0.0
          %v1328 = vmax.f32 %v1296, 0.0
          %v1329 = vmax.f32 %v1297, 0.0
          %v1330 = vmax.f32 %v1298, 0.0
          %v1331 = vmax.f32 %v1299, 0.0
          %v1332 = vmax.f32 %v1300, 0.0
          %v1333 = vmax.f32 %v1301, 0.0
          %v1334 = vmax.f32 %v1302, 0.0
          %v1335 = vmax.f32 %v1303, 0.0
          %v1336 = vmax.f32 %v1304, 0.0
          %v1337 = vmax.f32 %v1305, 0.0
          %v1338 = vmax.f32 %v1306, 0.0
          %v1339 = vmax.f32 %v1307, 0.0
          %v1340 = vmax.f32 %v1308, 0.0
          %v1341 = vmax.f32 %v1309, 0.0
          %v1342 = vmax.f32 %v1310, 0.0
          %v1343 = vmax.f32 %v1311, 0.0
          %v1344 = vmax.f32 %v1312, 0.0
          %v1345 = vmax.f32 %v1313, 0.0
          %v1346 = vmax.f32 %v1314, 0.0
          %v1347 = vmax.f32 %v1315, 0.0
          %v1348 = vmax.f32 %v1316, 0.0
          %v1349 = vmax.f32 %v1317, 0.0
          %v1350 = vmax.f32 %v1318, 0.0
          %v1351 = vmax.f32 %v1319, 0.0
          %v1352 = vmax.f32 %v1320, 0.0
          %v1353 = vmax.f32 %v1321, 0.0
          %v1354 = vmax.f32 %v1322, 0.0
          %v1355 = vpack.c.bf16 %v1324, %v1323
          %v1356 = vpack.c.bf16 %v1326, %v1325
          %v1357 = vpack.c.bf16 %v1328, %v1327
          %v1358 = vpack.c.bf16 %v1330, %v1329
          %v1359 = vpack.c.bf16 %v1332, %v1331
          %v1360 = vpack.c.bf16 %v1334, %v1333
          %v1361 = vpack.c.bf16 %v1336, %v1335
          %v1362 = vpack.c.bf16 %v1338, %v1337
          %v1363 = vpack.c.bf16 %v1340, %v1339
          %v1364 = vpack.c.bf16 %v1342, %v1341
          %v1365 = vpack.c.bf16 %v1344, %v1343
          %v1366 = vpack.c.bf16 %v1346, %v1345
          %v1367 = vpack.c.bf16 %v1348, %v1347
          %v1368 = vpack.c.bf16 %v1350, %v1349
          %v1369 = vpack.c.bf16 %v1352, %v1351
          %v1370 = vpack.c.bf16 %v1354, %v1353
          %v1387 = vunpack.c.l.b16 %v1355
          %v1388 = vunpack.c.h.b16 %v1355
          %v1389 = vunpack.c.l.b16 %v1356
          %v1390 = vunpack.c.h.b16 %v1356
          %v1391 = vunpack.c.l.b16 %v1357
          %v1392 = vunpack.c.h.b16 %v1357
          %v1393 = vunpack.c.l.b16 %v1358
          %v1394 = vunpack.c.h.b16 %v1358
          %v1395 = vunpack.c.l.b16 %v1359
          %v1396 = vunpack.c.h.b16 %v1359
          %v1397 = vunpack.c.l.b16 %v1360
          %v1398 = vunpack.c.h.b16 %v1360
          %v1399 = vunpack.c.l.b16 %v1361
          %v1400 = vunpack.c.h.b16 %v1361
          %v1401 = vunpack.c.l.b16 %v1362
          %v1402 = vunpack.c.h.b16 %v1362
          %v1403 = vunpack.c.l.b16 %v1363
          %v1404 = vunpack.c.h.b16 %v1363
          %v1405 = vunpack.c.l.b16 %v1364
          %v1406 = vunpack.c.h.b16 %v1364
          %v1407 = vunpack.c.l.b16 %v1365
          %v1408 = vunpack.c.h.b16 %v1365
          %v1409 = vunpack.c.l.b16 %v1366
          %v1410 = vunpack.c.h.b16 %v1366
          %v1411 = vunpack.c.l.b16 %v1367
          %v1412 = vunpack.c.h.b16 %v1367
          %v1413 = vunpack.c.l.b16 %v1368
          %v1414 = vunpack.c.h.b16 %v1368
          %v1415 = vunpack.c.l.b16 %v1369
          %v1416 = vunpack.c.h.b16 %v1369
          %v1417 = vunpack.c.l.b16 %v1370
          %v1418 = vunpack.c.h.b16 %v1370
          %v1419 = vpack.c.b16 %v1387, %v1387
          %v1420 = vpack.c.b16 %v1388, %v1388
          %v1421 = vpack.c.b16 %v1389, %v1389
          %v1422 = vpack.c.b16 %v1390, %v1390
          %v1423 = vpack.c.b16 %v1391, %v1391
          %v1424 = vpack.c.b16 %v1392, %v1392
          %v1425 = vpack.c.b16 %v1393, %v1393
          %v1426 = vpack.c.b16 %v1394, %v1394
          %v1427 = vpack.c.b16 %v1395, %v1395
          %v1428 = vpack.c.b16 %v1396, %v1396
          %v1429 = vpack.c.b16 %v1397, %v1397
          %v1430 = vpack.c.b16 %v1398, %v1398
          %v1431 = vpack.c.b16 %v1399, %v1399
          %v1432 = vpack.c.b16 %v1400, %v1400
          %v1433 = vpack.c.b16 %v1401, %v1401
          %v1434 = vpack.c.b16 %v1402, %v1402
          %v1435 = vpack.c.b16 %v1403, %v1403
          %v1436 = vpack.c.b16 %v1404, %v1404
          %v1437 = vpack.c.b16 %v1405, %v1405
          %v1438 = vpack.c.b16 %v1406, %v1406
          %v1439 = vpack.c.b16 %v1407, %v1407
          %v1440 = vpack.c.b16 %v1408, %v1408
          %v1441 = vpack.c.b16 %v1409, %v1409
          %v1442 = vpack.c.b16 %v1410, %v1410
          %v1443 = vpack.c.b16 %v1411, %v1411
          %v1444 = vpack.c.b16 %v1412, %v1412
          %v1445 = vpack.c.b16 %v1413, %v1413
          %v1446 = vpack.c.b16 %v1414, %v1414
          %v1447 = vpack.c.b16 %v1415, %v1415
          %v1448 = vpack.c.b16 %v1416, %v1416
          %v1449 = vpack.c.b16 %v1417, %v1417
          %v1450 = vpack.c.b16 %v1418, %v1418
          %1483 = vst [vmem:[%s276] sm:$0xf] %v1419
          %1484 = vst [vmem:[%s276 + $0x4] sm:$0xf] %v1420
          %1485 = vst [vmem:[%s276 + $0x8] sm:$0xf] %v1421
          %1486 = vst [vmem:[%s276 + $0xc] sm:$0xf] %v1422
          %1487 = vst [vmem:[%s276 + $0x10] sm:$0xf] %v1423
          %1488 = vst [vmem:[%s276 + $0x14] sm:$0xf] %v1424
          %1489 = vst [vmem:[%s276 + $0x18] sm:$0xf] %v1425
          %1490 = vst [vmem:[%s276 + $0x1c] sm:$0xf] %v1426
          %1491 = vst [vmem:[%s276 + $0x20] sm:$0xf] %v1427
          %1492 = vst [vmem:[%s276 + $0x24] sm:$0xf] %v1428
          %1493 = vst [vmem:[%s276 + $0x28] sm:$0xf] %v1429
          %1494 = vst [vmem:[%s276 + $0x2c] sm:$0xf] %v1430
          %1495 = vst [vmem:[%s276 + $0x30] sm:$0xf] %v1431
          %1496 = vst [vmem:[%s276 + $0x34] sm:$0xf] %v1432
          %1497 = vst [vmem:[%s276 + $0x38] sm:$0xf] %v1433
          %1498 = vst [vmem:[%s276 + $0x3c] sm:$0xf] %v1434
          %1499 = vst [vmem:[%s276 + $0x40] sm:$0xf] %v1435
          %1500 = vst [vmem:[%s276 + $0x44] sm:$0xf] %v1436
          %1501 = vst [vmem:[%s276 + $0x48] sm:$0xf] %v1437
          %1502 = vst [vmem:[%s276 + $0x4c] sm:$0xf] %v1438
          %1503 = vst [vmem:[%s276 + $0x50] sm:$0xf] %v1439
          %1504 = vst [vmem:[%s276 + $0x54] sm:$0xf] %v1440
          %1505 = vst [vmem:[%s276 + $0x58] sm:$0xf] %v1441
          %1506 = vst [vmem:[%s276 + $0x5c] sm:$0xf] %v1442
          %1507 = vst [vmem:[%s276 + $0x60] sm:$0xf] %v1443
          %1508 = vst [vmem:[%s276 + $0x64] sm:$0xf] %v1444
          %1509 = vst [vmem:[%s276 + $0x68] sm:$0xf] %v1445
          %1510 = vst [vmem:[%s276 + $0x6c] sm:$0xf] %v1446
          %1511 = vst [vmem:[%s276 + $0x70] sm:$0xf] %v1447
          %1512 = vst [vmem:[%s276 + $0x74] sm:$0xf] %v1448
          %1513 = vst [vmem:[%s276 + $0x78] sm:$0xf] %v1449
          %1514 = vst [vmem:[%s276 + $0x7c] sm:$0xf] %v1450
        $region52: #{tpu_custom_call.1} parent=31 // pred_fallthru
          _
        %s1515 = sand.u32 %s134, 1
        %s1516 = scalar_lea.sflag [#allocation5], %s1515
        %s1517 = sand.u32 %s134, 1
        %s1518 = smul.addr %s1517, 128
        %s1519 = scalar_lea.vmem [#allocation9], %s1518
        // Predicated region
        $region53: #{tpu_custom_call.1} parent=31 // pred_check
          %p1520 = pneg %p144
        $region54: #{tpu_custom_call.1} parent=31 // pred_check_branch
          %1522 = sbr.rel (%p1520) target = $region56
        $region55: #{tpu_custom_call.1} parent=31 // pred_region
          %s1523 = smul.u32 32, %s28
          %s1525 = ssub.s32 2048, 2048
          %1526 = vsyncadd %s1516, %s1525
          %s1527 = sadd.s32 %s29, %s1523
          %s1528 = smul.addr %s1527, 64
          %s1529 = scalar_lea.hbm %s3, %s1528
          %s1530 = sshll.u32 %s1519, 4
          %s1531 = int_to_ptr.vmem [resolvable:$true] %s1530
          %1536 = dma.vmem_to_hbm [thread:$0]  %s1531, 2048, %s1529, %s1516, 64, 64, 4
        $region56: #{tpu_custom_call.1} parent=31 // pred_fallthru
          _
      $region32: #{tpu_custom_call.1} parent=5 // pred_fallthru
        _
      %p1537 = scmp.le.s32.totalorder 2, %s18
      // Predicated region
      $region57: #{tpu_custom_call.1} parent=5 // pred_check
        %p1538 = pneg %p1537
      $region58: #{tpu_custom_call.1} parent=5 // pred_check_branch
        %1540 = sbr.rel (%p1538) target = $region60
      $region59: #{tpu_custom_call.1} parent=5 // pred_region
        %s1541 = ssub.s32 %s18, 2
        // Predicated region
        $region61: #{tpu_custom_call.1} parent=59 // pred_check
          %p1542 = pneg %p150
        $region62: #{tpu_custom_call.1} parent=59 // pred_check_branch
          %1544 = sbr.rel (%p1542) target = $region64
        $region63: #{tpu_custom_call.1} parent=59 // pred_region
          %s1545 = sand.u32 %s135, 1
          %s1546 = scalar_lea.sflag [#allocation5], %s1545
          %s1547 = sand.u32 %s135, 1
          %s1548 = smul.addr %s1547, 128
          %s1549 = scalar_lea.vmem [#allocation9], %s1548
          %1550 = dma.done %s1546, 2048
        $region64: #{tpu_custom_call.1} parent=59 // pred_fallthru
          _
      $region60: #{tpu_custom_call.1} parent=5 // pred_fallthru
        _
    $region6: #{tpu_custom_call.1} parent=1 // loop_footer
      %s22 = sadd.s32 1, %s18
    $region7: #{tpu_custom_call.1} parent=1 // loop_footer_branch
      %17 = sbr.rel target = $region3
    $region8: #{tpu_custom_call.1} parent=1 // loop_exit
      _
    %1551 = vsyncpa [#allocation4], 1
    %s1552 = scalar_lea.sflag [#allocation4], 1
    %1553 = vsyncpa %s1552, 1
    %1554 = vsyncpa [#allocation7], 1
    %s1555 = scalar_lea.sflag [#allocation7], 1
    %1556 = vsyncpa %s1555, 1
    %1557 = vsyncpa [#allocation5], 1
    %s1558 = scalar_lea.sflag [#allocation5], 1
    %1559 = vsyncpa %s1558, 1

</llo_original>
